<compile_context>
chip_gen: v5e
topology: v5e:2x2
jax: 0.10.0
libtpu: 0.0.40
codegen_flags: <defaults>
</compile_context>

<pallas_src>
import jax
import jax.numpy as jnp
from jax import lax
from jax.experimental import pallas as pl
from jax.experimental.pallas import tpu as pltpu

# ----- synthetic config (small shapes) -----
T, B, E = 8, 2, 32        # seq len, batch, word embedding dim
H = 32                    # enc_lstm_dim
FC = 64                   # fc_dim
NC = 3                    # n_classes
INPUTDIM = 4 * 2 * H      # NLINet inputdim for the BiLSTM-max encoder (= 256)
FCP = 128                 # lane-padded classifier width (FC and NC padded to 128)
B2P = 8                   # sublane-padded stacked batch (2B = 4 -> 8)
GATES = (0, 1, 3, 2)      # PyTorch gate order (i,f,g,o) -> merged order (i,f,o,g)


def nlinet_kernel(x_ref, wenc_ref, wcls_ref, bcls_ref, out_ref, xi_ref):
    H2, H4 = 2 * H, 4 * H
    E2 = 2 * E

    # ---- encoder weight slab views (static slices, zero runtime cost) ----
    wi = wenc_ref[0:E2, :]                                  # (2E, 8H) bf16
    wh = wenc_ref[E2:E2 + H2, :]                            # (2H, 8H) bf16
    b_enc = wenc_ref[E2 + H2:E2 + H2 + 1, :].astype(jnp.float32)  # (1, 8H)

    # ---- input projection: all timesteps, both sentences, both directions,
    # bias folded in.  x rows carry [x_t | x_{T-1-t}], so the bwd direction's
    # reversed timestep lands in the bwd lanes of block t.  Staged in VMEM
    # scratch so it does not occupy vregs across the unrolled recurrence.
    xi_ref[...] = (jnp.dot(x_ref[...], wi, preferred_element_type=jnp.float32)
                   + b_enc)                                 # (T*B2P, 8H) f32

    # loop-invariant lane mask for the single mixed (o|g) vreg
    mix_sig = lax.broadcasted_iota(jnp.int32, (B2P, H4), 1) < H2

    # merged bidirectional state: lanes [0:H] = fwd, [H:2H] = bwd
    h_cat = jnp.zeros((B2P, H2), jnp.float32)
    c_cat = jnp.zeros((B2P, H2), jnp.float32)
    m_cat = jnp.full((B2P, H2), -jnp.inf, jnp.float32)

    # ---- fully unrolled time loop: ONE (8,64)@(64,256) recurrent MXU push per
    # step covering both directions; aligned full-tile xi reads.
    for t in range(T):
        r = t * B2P
        g = xi_ref[r:r + B2P, :] + jnp.dot(
            h_cat.astype(jnp.bfloat16), wh, preferred_element_type=jnp.float32)
        g0 = g[:, :H4]                                      # vreg0: [i_cat|f_cat]
        g1 = g[:, H4:]                                      # vreg1: [o_cat|g_cat]
        a0 = jax.nn.sigmoid(g0)                             # full-vreg sigmoid
        a1 = jnp.where(mix_sig, jax.nn.sigmoid(g1), jnp.tanh(g1))
        i_cat, f_cat = a0[:, :H2], a0[:, H2:]
        o_cat, gg = a1[:, :H2], a1[:, H2:]
        c_cat = f_cat * c_cat + i_cat * gg
        h_cat = o_cat * jnp.tanh(c_cat)
        m_cat = jnp.maximum(m_cat, h_cat)                   # max-pool over time

    # max-pooled BiLSTM encodings: rows 0:B are s1 (u), rows B:2B are s2 (v);
    # lane layout [fwd_max | bwd_max] matches the reference concat order.
    u = m_cat[0:B, :]
    v = m_cat[B:2 * B, :]
    feats = jnp.concatenate([u, v, jnp.abs(u - v), u * v], axis=1)  # (B, 8H*?)=(B,256)

    # ---- classifier (nonlinear_fc; Dropout is identity at inference) ----
    w1 = wcls_ref[0:INPUTDIM, :]                            # (256, 128) bf16
    w2 = wcls_ref[INPUTDIM:INPUTDIM + FCP, :]               # (128, 128) bf16
    w3 = wcls_ref[INPUTDIM + FCP:INPUTDIM + 2 * FCP, :]     # (128, 128) bf16
    bc = bcls_ref[...]                                      # (8, 128) f32

    h1 = jnp.tanh(jnp.dot(feats.astype(jnp.bfloat16), w1,
                          preferred_element_type=jnp.float32) + bc[0:1, :])
    h2 = jnp.tanh(jnp.dot(h1.astype(jnp.bfloat16), w2,
                          preferred_element_type=jnp.float32) + bc[1:2, :])
    out_ref[...] = (jnp.dot(h2.astype(jnp.bfloat16), w3,
                            preferred_element_type=jnp.float32) + bc[2:3, :])


def pack_params(params):
    """One-time layout plumbing (model load time, NOT per call).

    Returns (wenc, wcls, bcls):
      wenc = [Wi_big (2E,8H) ; Wh_big (2H,8H) ; bias (8,8H)]  bf16
      wcls = [W1 (256,128) ; W2 (128,128) ; W3 (128,128)]      bf16
      bcls = rows [b1; b2; b3; 0...] (8,128)                    f32
    Merged gate lane order: [i_f i_b | f_f f_b | o_f o_b | g_f g_b].
    """
    wi_f, wh_f, b_f, wi_b, wh_b, b_b, w1, b1, w2, b2, w3, b3 = params

    def bidir(a, b):
        za = jnp.zeros((a.shape[0], b.shape[1]), jnp.float32)
        zb = jnp.zeros((b.shape[0], a.shape[1]), jnp.float32)
        return jnp.concatenate([jnp.concatenate([a, za], axis=1),
                                jnp.concatenate([zb, b], axis=1)], axis=0)

    wi_big = jnp.concatenate([bidir(wi_f[k], wi_b[k]) for k in GATES], axis=1)
    wh_big = jnp.concatenate([bidir(wh_f[k], wh_b[k]) for k in GATES], axis=1)
    b_big = jnp.concatenate(
        [jnp.concatenate([b_f[k], b_b[k]], axis=1) for k in GATES], axis=1)
    b_big = jnp.pad(b_big, ((0, 7), (0, 0)))                # (8, 8H)
    wenc = jnp.concatenate([wi_big, wh_big, b_big], axis=0).astype(jnp.bfloat16)

    def pad_to(a, rows, cols):
        return jnp.pad(a, ((0, rows - a.shape[0]), (0, cols - a.shape[1])))

    wcls = jnp.concatenate([pad_to(w1, INPUTDIM, FCP),
                            pad_to(w2, FCP, FCP),
                            pad_to(w3, FCP, FCP)], axis=0).astype(jnp.bfloat16)
    bcls = jnp.concatenate([pad_to(b1, 1, FCP), pad_to(b2, 1, FCP),
                            pad_to(b3, 1, FCP),
                            jnp.zeros((5, FCP), jnp.float32)], axis=0)
    return wenc, wcls, bcls


def nlinet_forward(s1, s2, packed):
    """s1, s2: (T, B, E).  packed = pack_params(raw_params) (done once)."""
    wenc, wcls, bcls = packed

    # stack s1/s2 along batch, pad to 8 sublanes, append the time-reversed copy
    # along features so the bwd direction's projection lands correctly.
    x = jnp.concatenate([s1, s2], axis=1)                   # (T, 2B, E)
    x = jnp.pad(x, ((0, 0), (0, B2P - 2 * B), (0, 0)))      # (T, B2P, E)
    x = jnp.concatenate([x, x[::-1]], axis=2)               # (T, B2P, 2E)
    x = x.reshape(T * B2P, 2 * E).astype(jnp.bfloat16)      # (T*B2P, 2E)

    out_pad = pl.pallas_call(
        nlinet_kernel,
        out_shape=jax.ShapeDtypeStruct((B, FCP), jnp.float32),
        in_specs=[pl.BlockSpec(memory_space=pltpu.MemorySpace.VMEM)] * 4,
        out_specs=pl.BlockSpec(memory_space=pltpu.MemorySpace.VMEM),
        scratch_shapes=[pltpu.VMEM((T * B2P, 8 * H), jnp.float32)],
    )(x, wenc, wcls, bcls)
    return out_pad[:, :NC]


# ----- pure-JAX reference (for a sanity check of the kernel) -----
def _ref_encoder(x, wi, wh, b, reverse):
    def step(carry, x_t):
        h, c = carry
        gates = [jnp.dot(x_t, wi[k]) + jnp.dot(h, wh[k]) + b[k] for k in range(4)]
        i_g, f_g = jax.nn.sigmoid(gates[0]), jax.nn.sigmoid(gates[1])
        g_g, o_g = jnp.tanh(gates[2]), jax.nn.sigmoid(gates[3])
        c_n = f_g * c + i_g * g_g
        h_n = o_g * jnp.tanh(c_n)
        return (h_n, c_n), h_n
    xs = x[::-1] if reverse else x
    zeros = jnp.zeros((B, H), jnp.float32)
    _, hs = lax.scan(step, (zeros, zeros), xs)
    return hs.max(axis=0)


def _ref_forward(s1, s2, p):
    wi_f, wh_f, b_f, wi_b, wh_b, b_b, w1, b1, w2, b2, w3, b3 = p
    def enc(s):
        return jnp.concatenate([_ref_encoder(s, wi_f, wh_f, b_f, False),
                                _ref_encoder(s, wi_b, wh_b, b_b, True)], axis=1)
    u, v = enc(s1), enc(s2)
    feats = jnp.concatenate([u, v, jnp.abs(u - v), u * v], axis=1)
    h1 = jnp.tanh(jnp.dot(feats, w1) + b1)
    h2 = jnp.tanh(jnp.dot(h1, w2) + b2)
    return jnp.dot(h2, w3) + b3


if __name__ == "__main__":
    key = jax.random.PRNGKey(0)
    ks = jax.random.split(key, 16)

    s1 = jax.random.normal(ks[0], (T, B, E), jnp.float32)
    s2 = jax.random.normal(ks[1], (T, B, E), jnp.float32)

    def p(k, shape, scale=0.1):
        return (scale * jax.random.normal(k, shape)).astype(jnp.float32)

    # Shared BiLSTM encoder weights: per-gate stacks (PyTorch gate order i, f, g, o).
    wi_f = p(ks[2], (4, E, H)); wh_f = p(ks[3], (4, H, H)); b_f = p(ks[4], (4, 1, H))
    wi_b = p(ks[5], (4, E, H)); wh_b = p(ks[6], (4, H, H)); b_b = p(ks[7], (4, 1, H))
    # Classifier weights.
    w1 = p(ks[8], (INPUTDIM, FC)); b1 = p(ks[9], (1, FC))
    w2 = p(ks[10], (FC, FC));      b2 = p(ks[11], (1, FC))
    w3 = p(ks[12], (FC, NC));      b3 = p(ks[13], (1, NC))

    params = (wi_f, wh_f, b_f, wi_b, wh_b, b_b, w1, b1, w2, b2, w3, b3)

    packed = jax.tree_util.tree_map(jax.block_until_ready, pack_params(params))
    fwd = jax.jit(nlinet_forward)

    out = fwd(s1, s2, packed)
    out = jax.block_until_ready(out)
    assert out.shape == (B, NC) and out.dtype == jnp.float32

    ref = jax.block_until_ready(_ref_forward(s1, s2, params))
    assert jnp.allclose(out, ref, atol=5e-2, rtol=5e-2), (out, ref)

    print("KERNEL_OK")
</pallas_src>

<mosaic_0001>
module attributes {stable_mosaic.version = 11 : i64} {
  func.func @nlinet_kernel(%arg0: memref<64x64xbf16, #tpu.memory_space<vmem>>, %arg1: memref<136x256xbf16, #tpu.memory_space<vmem>>, %arg2: memref<512x128xbf16, #tpu.memory_space<vmem>>, %arg3: memref<8x128xf32, #tpu.memory_space<vmem>>, %arg4: memref<2x128xf32, #tpu.memory_space<vmem>>, %arg5: memref<64x256xf32, #tpu.memory_space<vmem>>) attributes {dimension_semantics = [], scalar_prefetch = 0 : i64, scratch_operands = 1 : i64, tpu.core_type = #tpu.core_type<tc>} {
    %c0 = arith.constant 0 : index
    %c0_0 = arith.constant 0 : index
    %0 = vector.load %arg1[%c0, %c0_0] : memref<136x256xbf16, #tpu.memory_space<vmem>>, vector<64x256xbf16>
    %c64 = arith.constant 64 : index
    %c0_1 = arith.constant 0 : index
    %1 = vector.load %arg1[%c64, %c0_1] : memref<136x256xbf16, #tpu.memory_space<vmem>>, vector<64x256xbf16>
    %c128 = arith.constant 128 : index
    %c0_2 = arith.constant 0 : index
    %2 = vector.load %arg1[%c128, %c0_2] : memref<136x256xbf16, #tpu.memory_space<vmem>>, vector<1x256xbf16>
    %3 = arith.extf %2 : vector<1x256xbf16> to vector<1x256xf32>
    %c0_3 = arith.constant 0 : index
    %c0_4 = arith.constant 0 : index
    %4 = vector.load %arg0[%c0_3, %c0_4] : memref<64x64xbf16, #tpu.memory_space<vmem>>, vector<64x64xbf16>
    %cst = arith.constant dense<0.000000e+00> : vector<64x256xf32>
    %5 = tpu.matmul %4, %0, %cst {dimension_numbers = #tpu.dot_dimension_numbers<[1], [0], [0], [1], [0, 0, 1, 1], [], []>} : vector<64x64xbf16>, vector<64x256xbf16>, vector<64x256xf32> -> vector<64x256xf32>
    %6 = vector.broadcast %3 : vector<1x256xf32> to vector<64x256xf32>
    %7 = arith.addf %5, %6 : vector<64x256xf32>
    %c0_5 = arith.constant 0 : index
    %c0_6 = arith.constant 0 : index
    %8 = vector.load %arg5[%c0_5, %c0_6] : memref<64x256xf32, #tpu.memory_space<vmem>>, vector<64x256xf32>
    tpu.vector_store %arg5[%c0_5, %c0_6], %7 {strides = array<i32>} : memref<64x256xf32, #tpu.memory_space<vmem>>, vector<64x256xf32>,
    %9 = tpu.iota {dimensions = array<i32: 1>} : vector<8x128xi32>
    %c64_i32 = arith.constant 64 : i32
    %10 = vector.broadcast %c64_i32 : i32 to vector<8x128xi32>
    %11 = arith.cmpi slt, %9, %10 : vector<8x128xi32>
    %cst_7 = arith.constant 0.000000e+00 : f32
    %12 = vector.broadcast %cst_7 : f32 to vector<8x64xf32>
    %cst_8 = arith.constant 0.000000e+00 : f32
    %13 = vector.broadcast %cst_8 : f32 to vector<8x64xf32>
    %cst_9 = arith.constant 0xFF800000 : f32
    %14 = vector.broadcast %cst_9 : f32 to vector<8x64xf32>
    %c0_10 = arith.constant 0 : index
    %c0_11 = arith.constant 0 : index
    %15 = vector.load %arg5[%c0_10, %c0_11] : memref<64x256xf32, #tpu.memory_space<vmem>>, vector<8x256xf32>
    %16 = arith.truncf %12 : vector<8x64xf32> to vector<8x64xbf16>
    %cst_12 = arith.constant dense<0.000000e+00> : vector<8x256xf32>
    %17 = tpu.matmul %16, %1, %cst_12 {dimension_numbers = #tpu.dot_dimension_numbers<[1], [0], [0], [1], [0, 0, 1, 1], [], []>} : vector<8x64xbf16>, vector<64x256xbf16>, vector<8x256xf32> -> vector<8x256xf32>
    %18 = arith.addf %15, %17 : vector<8x256xf32>
    %19 = vector.extract_strided_slice %18 {offsets = [0, 0], sizes = [8, 128], strides = [1, 1]} : vector<8x256xf32> to vector<8x128xf32>
    %20 = vector.extract_strided_slice %18 {offsets = [0, 128], sizes = [8, 128], strides = [1, 1]} : vector<8x256xf32> to vector<8x128xf32>
    %21 = arith.negf %19 : vector<8x128xf32>
    %22 = math.exp %21 : vector<8x128xf32>
    %cst_13 = arith.constant 1.000000e+00 : f32
    %23 = vector.broadcast %cst_13 : f32 to vector<8x128xf32>
    %24 = arith.addf %23, %22 : vector<8x128xf32>
    %25 = arith.divf %23, %24 : vector<8x128xf32>
    %26 = arith.negf %20 : vector<8x128xf32>
    %27 = math.exp %26 : vector<8x128xf32>
    %cst_14 = arith.constant 1.000000e+00 : f32
    %28 = vector.broadcast %cst_14 : f32 to vector<8x128xf32>
    %29 = arith.addf %28, %27 : vector<8x128xf32>
    %30 = arith.divf %28, %29 : vector<8x128xf32>
    %31 = math.tanh %20 : vector<8x128xf32>
    %32 = arith.select %11, %30, %31 : vector<8x128xi1>, vector<8x128xf32>
    %33 = vector.extract_strided_slice %25 {offsets = [0, 0], sizes = [8, 64], strides = [1, 1]} : vector<8x128xf32> to vector<8x64xf32>
    %34 = vector.extract_strided_slice %25 {offsets = [0, 64], sizes = [8, 64], strides = [1, 1]} : vector<8x128xf32> to vector<8x64xf32>
    %35 = vector.extract_strided_slice %32 {offsets = [0, 0], sizes = [8, 64], strides = [1, 1]} : vector<8x128xf32> to vector<8x64xf32>
    %36 = vector.extract_strided_slice %32 {offsets = [0, 64], sizes = [8, 64], strides = [1, 1]} : vector<8x128xf32> to vector<8x64xf32>
    %37 = arith.mulf %34, %13 : vector<8x64xf32>
    %38 = arith.mulf %33, %36 : vector<8x64xf32>
    %39 = arith.addf %37, %38 : vector<8x64xf32>
    %40 = math.tanh %39 : vector<8x64xf32>
    %41 = arith.mulf %35, %40 : vector<8x64xf32>
    %42 = arith.maximumf %14, %41 : vector<8x64xf32>
    %c8 = arith.constant 8 : index
    %c0_15 = arith.constant 0 : index
    %43 = vector.load %arg5[%c8, %c0_15] : memref<64x256xf32, #tpu.memory_space<vmem>>, vector<8x256xf32>
    %44 = arith.truncf %41 : vector<8x64xf32> to vector<8x64xbf16>
    %cst_16 = arith.constant dense<0.000000e+00> : vector<8x256xf32>
    %45 = tpu.matmul %44, %1, %cst_16 {dimension_numbers = #tpu.dot_dimension_numbers<[1], [0], [0], [1], [0, 0, 1, 1], [], []>} : vector<8x64xbf16>, vector<64x256xbf16>, vector<8x256xf32> -> vector<8x256xf32>
    %46 = arith.addf %43, %45 : vector<8x256xf32>
    %47 = vector.extract_strided_slice %46 {offsets = [0, 0], sizes = [8, 128], strides = [1, 1]} : vector<8x256xf32> to vector<8x128xf32>
    %48 = vector.extract_strided_slice %46 {offsets = [0, 128], sizes = [8, 128], strides = [1, 1]} : vector<8x256xf32> to vector<8x128xf32>
    %49 = arith.negf %47 : vector<8x128xf32>
    %50 = math.exp %49 : vector<8x128xf32>
    %cst_17 = arith.constant 1.000000e+00 : f32
    %51 = vector.broadcast %cst_17 : f32 to vector<8x128xf32>
    %52 = arith.addf %51, %50 : vector<8x128xf32>
    %53 = arith.divf %51, %52 : vector<8x128xf32>
    %54 = arith.negf %48 : vector<8x128xf32>
    %55 = math.exp %54 : vector<8x128xf32>
    %cst_18 = arith.constant 1.000000e+00 : f32
    %56 = vector.broadcast %cst_18 : f32 to vector<8x128xf32>
    %57 = arith.addf %56, %55 : vector<8x128xf32>
    %58 = arith.divf %56, %57 : vector<8x128xf32>
    %59 = math.tanh %48 : vector<8x128xf32>
    %60 = arith.select %11, %58, %59 : vector<8x128xi1>, vector<8x128xf32>
    %61 = vector.extract_strided_slice %53 {offsets = [0, 0], sizes = [8, 64], strides = [1, 1]} : vector<8x128xf32> to vector<8x64xf32>
    %62 = vector.extract_strided_slice %53 {offsets = [0, 64], sizes = [8, 64], strides = [1, 1]} : vector<8x128xf32> to vector<8x64xf32>
    %63 = vector.extract_strided_slice %60 {offsets = [0, 0], sizes = [8, 64], strides = [1, 1]} : vector<8x128xf32> to vector<8x64xf32>
    %64 = vector.extract_strided_slice %60 {offsets = [0, 64], sizes = [8, 64], strides = [1, 1]} : vector<8x128xf32> to vector<8x64xf32>
    %65 = arith.mulf %62, %39 : vector<8x64xf32>
    %66 = arith.mulf %61, %64 : vector<8x64xf32>
    %67 = arith.addf %65, %66 : vector<8x64xf32>
    %68 = math.tanh %67 : vector<8x64xf32>
    %69 = arith.mulf %63, %68 : vector<8x64xf32>
    %70 = arith.maximumf %42, %69 : vector<8x64xf32>
    %c16 = arith.constant 16 : index
    %c0_19 = arith.constant 0 : index
    %71 = vector.load %arg5[%c16, %c0_19] : memref<64x256xf32, #tpu.memory_space<vmem>>, vector<8x256xf32>
    %72 = arith.truncf %69 : vector<8x64xf32> to vector<8x64xbf16>
    %cst_20 = arith.constant dense<0.000000e+00> : vector<8x256xf32>
    %73 = tpu.matmul %72, %1, %cst_20 {dimension_numbers = #tpu.dot_dimension_numbers<[1], [0], [0], [1], [0, 0, 1, 1], [], []>} : vector<8x64xbf16>, vector<64x256xbf16>, vector<8x256xf32> -> vector<8x256xf32>
    %74 = arith.addf %71, %73 : vector<8x256xf32>
    %75 = vector.extract_strided_slice %74 {offsets = [0, 0], sizes = [8, 128], strides = [1, 1]} : vector<8x256xf32> to vector<8x128xf32>
    %76 = vector.extract_strided_slice %74 {offsets = [0, 128], sizes = [8, 128], strides = [1, 1]} : vector<8x256xf32> to vector<8x128xf32>
    %77 = arith.negf %75 : vector<8x128xf32>
    %78 = math.exp %77 : vector<8x128xf32>
    %cst_21 = arith.constant 1.000000e+00 : f32
    %79 = vector.broadcast %cst_21 : f32 to vector<8x128xf32>
    %80 = arith.addf %79, %78 : vector<8x128xf32>
    %81 = arith.divf %79, %80 : vector<8x128xf32>
    %82 = arith.negf %76 : vector<8x128xf32>
    %83 = math.exp %82 : vector<8x128xf32>
    %cst_22 = arith.constant 1.000000e+00 : f32
    %84 = vector.broadcast %cst_22 : f32 to vector<8x128xf32>
    %85 = arith.addf %84, %83 : vector<8x128xf32>
    %86 = arith.divf %84, %85 : vector<8x128xf32>
    %87 = math.tanh %76 : vector<8x128xf32>
    %88 = arith.select %11, %86, %87 : vector<8x128xi1>, vector<8x128xf32>
    %89 = vector.extract_strided_slice %81 {offsets = [0, 0], sizes = [8, 64], strides = [1, 1]} : vector<8x128xf32> to vector<8x64xf32>
    %90 = vector.extract_strided_slice %81 {offsets = [0, 64], sizes = [8, 64], strides = [1, 1]} : vector<8x128xf32> to vector<8x64xf32>
    %91 = vector.extract_strided_slice %88 {offsets = [0, 0], sizes = [8, 64], strides = [1, 1]} : vector<8x128xf32> to vector<8x64xf32>
    %92 = vector.extract_strided_slice %88 {offsets = [0, 64], sizes = [8, 64], strides = [1, 1]} : vector<8x128xf32> to vector<8x64xf32>
    %93 = arith.mulf %90, %67 : vector<8x64xf32>
    %94 = arith.mulf %89, %92 : vector<8x64xf32>
    %95 = arith.addf %93, %94 : vector<8x64xf32>
    %96 = math.tanh %95 : vector<8x64xf32>
    %97 = arith.mulf %91, %96 : vector<8x64xf32>
    %98 = arith.maximumf %70, %97 : vector<8x64xf32>
    %c24 = arith.constant 24 : index
    %c0_23 = arith.constant 0 : index
    %99 = vector.load %arg5[%c24, %c0_23] : memref<64x256xf32, #tpu.memory_space<vmem>>, vector<8x256xf32>
    %100 = arith.truncf %97 : vector<8x64xf32> to vector<8x64xbf16>
    %cst_24 = arith.constant dense<0.000000e+00> : vector<8x256xf32>
    %101 = tpu.matmul %100, %1, %cst_24 {dimension_numbers = #tpu.dot_dimension_numbers<[1], [0], [0], [1], [0, 0, 1, 1], [], []>} : vector<8x64xbf16>, vector<64x256xbf16>, vector<8x256xf32> -> vector<8x256xf32>
    %102 = arith.addf %99, %101 : vector<8x256xf32>
    %103 = vector.extract_strided_slice %102 {offsets = [0, 0], sizes = [8, 128], strides = [1, 1]} : vector<8x256xf32> to vector<8x128xf32>
    %104 = vector.extract_strided_slice %102 {offsets = [0, 128], sizes = [8, 128], strides = [1, 1]} : vector<8x256xf32> to vector<8x128xf32>
    %105 = arith.negf %103 : vector<8x128xf32>
    %106 = math.exp %105 : vector<8x128xf32>
    %cst_25 = arith.constant 1.000000e+00 : f32
    %107 = vector.broadcast %cst_25 : f32 to vector<8x128xf32>
    %108 = arith.addf %107, %106 : vector<8x128xf32>
    %109 = arith.divf %107, %108 : vector<8x128xf32>
    %110 = arith.negf %104 : vector<8x128xf32>
    %111 = math.exp %110 : vector<8x128xf32>
    %cst_26 = arith.constant 1.000000e+00 : f32
    %112 = vector.broadcast %cst_26 : f32 to vector<8x128xf32>
    %113 = arith.addf %112, %111 : vector<8x128xf32>
    %114 = arith.divf %112, %113 : vector<8x128xf32>
    %115 = math.tanh %104 : vector<8x128xf32>
    %116 = arith.select %11, %114, %115 : vector<8x128xi1>, vector<8x128xf32>
    %117 = vector.extract_strided_slice %109 {offsets = [0, 0], sizes = [8, 64], strides = [1, 1]} : vector<8x128xf32> to vector<8x64xf32>
    %118 = vector.extract_strided_slice %109 {offsets = [0, 64], sizes = [8, 64], strides = [1, 1]} : vector<8x128xf32> to vector<8x64xf32>
    %119 = vector.extract_strided_slice %116 {offsets = [0, 0], sizes = [8, 64], strides = [1, 1]} : vector<8x128xf32> to vector<8x64xf32>
    %120 = vector.extract_strided_slice %116 {offsets = [0, 64], sizes = [8, 64], strides = [1, 1]} : vector<8x128xf32> to vector<8x64xf32>
    %121 = arith.mulf %118, %95 : vector<8x64xf32>
    %122 = arith.mulf %117, %120 : vector<8x64xf32>
    %123 = arith.addf %121, %122 : vector<8x64xf32>
    %124 = math.tanh %123 : vector<8x64xf32>
    %125 = arith.mulf %119, %124 : vector<8x64xf32>
    %126 = arith.maximumf %98, %125 : vector<8x64xf32>
    %c32 = arith.constant 32 : index
    %c0_27 = arith.constant 0 : index
    %127 = vector.load %arg5[%c32, %c0_27] : memref<64x256xf32, #tpu.memory_space<vmem>>, vector<8x256xf32>
    %128 = arith.truncf %125 : vector<8x64xf32> to vector<8x64xbf16>
    %cst_28 = arith.constant dense<0.000000e+00> : vector<8x256xf32>
    %129 = tpu.matmul %128, %1, %cst_28 {dimension_numbers = #tpu.dot_dimension_numbers<[1], [0], [0], [1], [0, 0, 1, 1], [], []>} : vector<8x64xbf16>, vector<64x256xbf16>, vector<8x256xf32> -> vector<8x256xf32>
    %130 = arith.addf %127, %129 : vector<8x256xf32>
    %131 = vector.extract_strided_slice %130 {offsets = [0, 0], sizes = [8, 128], strides = [1, 1]} : vector<8x256xf32> to vector<8x128xf32>
    %132 = vector.extract_strided_slice %130 {offsets = [0, 128], sizes = [8, 128], strides = [1, 1]} : vector<8x256xf32> to vector<8x128xf32>
    %133 = arith.negf %131 : vector<8x128xf32>
    %134 = math.exp %133 : vector<8x128xf32>
    %cst_29 = arith.constant 1.000000e+00 : f32
    %135 = vector.broadcast %cst_29 : f32 to vector<8x128xf32>
    %136 = arith.addf %135, %134 : vector<8x128xf32>
    %137 = arith.divf %135, %136 : vector<8x128xf32>
    %138 = arith.negf %132 : vector<8x128xf32>
    %139 = math.exp %138 : vector<8x128xf32>
    %cst_30 = arith.constant 1.000000e+00 : f32
    %140 = vector.broadcast %cst_30 : f32 to vector<8x128xf32>
    %141 = arith.addf %140, %139 : vector<8x128xf32>
    %142 = arith.divf %140, %141 : vector<8x128xf32>
    %143 = math.tanh %132 : vector<8x128xf32>
    %144 = arith.select %11, %142, %143 : vector<8x128xi1>, vector<8x128xf32>
    %145 = vector.extract_strided_slice %137 {offsets = [0, 0], sizes = [8, 64], strides = [1, 1]} : vector<8x128xf32> to vector<8x64xf32>
    %146 = vector.extract_strided_slice %137 {offsets = [0, 64], sizes = [8, 64], strides = [1, 1]} : vector<8x128xf32> to vector<8x64xf32>
    %147 = vector.extract_strided_slice %144 {offsets = [0, 0], sizes = [8, 64], strides = [1, 1]} : vector<8x128xf32> to vector<8x64xf32>
    %148 = vector.extract_strided_slice %144 {offsets = [0, 64], sizes = [8, 64], strides = [1, 1]} : vector<8x128xf32> to vector<8x64xf32>
    %149 = arith.mulf %146, %123 : vector<8x64xf32>
    %150 = arith.mulf %145, %148 : vector<8x64xf32>
    %151 = arith.addf %149, %150 : vector<8x64xf32>
    %152 = math.tanh %151 : vector<8x64xf32>
    %153 = arith.mulf %147, %152 : vector<8x64xf32>
    %154 = arith.maximumf %126, %153 : vector<8x64xf32>
    %c40 = arith.constant 40 : index
    %c0_31 = arith.constant 0 : index
    %155 = vector.load %arg5[%c40, %c0_31] : memref<64x256xf32, #tpu.memory_space<vmem>>, vector<8x256xf32>
    %156 = arith.truncf %153 : vector<8x64xf32> to vector<8x64xbf16>
    %cst_32 = arith.constant dense<0.000000e+00> : vector<8x256xf32>
    %157 = tpu.matmul %156, %1, %cst_32 {dimension_numbers = #tpu.dot_dimension_numbers<[1], [0], [0], [1], [0, 0, 1, 1], [], []>} : vector<8x64xbf16>, vector<64x256xbf16>, vector<8x256xf32> -> vector<8x256xf32>
    %158 = arith.addf %155, %157 : vector<8x256xf32>
    %159 = vector.extract_strided_slice %158 {offsets = [0, 0], sizes = [8, 128], strides = [1, 1]} : vector<8x256xf32> to vector<8x128xf32>
    %160 = vector.extract_strided_slice %158 {offsets = [0, 128], sizes = [8, 128], strides = [1, 1]} : vector<8x256xf32> to vector<8x128xf32>
    %161 = arith.negf %159 : vector<8x128xf32>
    %162 = math.exp %161 : vector<8x128xf32>
    %cst_33 = arith.constant 1.000000e+00 : f32
    %163 = vector.broadcast %cst_33 : f32 to vector<8x128xf32>
    %164 = arith.addf %163, %162 : vector<8x128xf32>
    %165 = arith.divf %163, %164 : vector<8x128xf32>
    %166 = arith.negf %160 : vector<8x128xf32>
    %167 = math.exp %166 : vector<8x128xf32>
    %cst_34 = arith.constant 1.000000e+00 : f32
    %168 = vector.broadcast %cst_34 : f32 to vector<8x128xf32>
    %169 = arith.addf %168, %167 : vector<8x128xf32>
    %170 = arith.divf %168, %169 : vector<8x128xf32>
    %171 = math.tanh %160 : vector<8x128xf32>
    %172 = arith.select %11, %170, %171 : vector<8x128xi1>, vector<8x128xf32>
    %173 = vector.extract_strided_slice %165 {offsets = [0, 0], sizes = [8, 64], strides = [1, 1]} : vector<8x128xf32> to vector<8x64xf32>
    %174 = vector.extract_strided_slice %165 {offsets = [0, 64], sizes = [8, 64], strides = [1, 1]} : vector<8x128xf32> to vector<8x64xf32>
    %175 = vector.extract_strided_slice %172 {offsets = [0, 0], sizes = [8, 64], strides = [1, 1]} : vector<8x128xf32> to vector<8x64xf32>
    %176 = vector.extract_strided_slice %172 {offsets = [0, 64], sizes = [8, 64], strides = [1, 1]} : vector<8x128xf32> to vector<8x64xf32>
    %177 = arith.mulf %174, %151 : vector<8x64xf32>
    %178 = arith.mulf %173, %176 : vector<8x64xf32>
    %179 = arith.addf %177, %178 : vector<8x64xf32>
    %180 = math.tanh %179 : vector<8x64xf32>
    %181 = arith.mulf %175, %180 : vector<8x64xf32>
    %182 = arith.maximumf %154, %181 : vector<8x64xf32>
    %c48 = arith.constant 48 : index
    %c0_35 = arith.constant 0 : index
    %183 = vector.load %arg5[%c48, %c0_35] : memref<64x256xf32, #tpu.memory_space<vmem>>, vector<8x256xf32>
    %184 = arith.truncf %181 : vector<8x64xf32> to vector<8x64xbf16>
    %cst_36 = arith.constant dense<0.000000e+00> : vector<8x256xf32>
    %185 = tpu.matmul %184, %1, %cst_36 {dimension_numbers = #tpu.dot_dimension_numbers<[1], [0], [0], [1], [0, 0, 1, 1], [], []>} : vector<8x64xbf16>, vector<64x256xbf16>, vector<8x256xf32> -> vector<8x256xf32>
    %186 = arith.addf %183, %185 : vector<8x256xf32>
    %187 = vector.extract_strided_slice %186 {offsets = [0, 0], sizes = [8, 128], strides = [1, 1]} : vector<8x256xf32> to vector<8x128xf32>
    %188 = vector.extract_strided_slice %186 {offsets = [0, 128], sizes = [8, 128], strides = [1, 1]} : vector<8x256xf32> to vector<8x128xf32>
    %189 = arith.negf %187 : vector<8x128xf32>
    %190 = math.exp %189 : vector<8x128xf32>
    %cst_37 = arith.constant 1.000000e+00 : f32
    %191 = vector.broadcast %cst_37 : f32 to vector<8x128xf32>
    %192 = arith.addf %191, %190 : vector<8x128xf32>
    %193 = arith.divf %191, %192 : vector<8x128xf32>
    %194 = arith.negf %188 : vector<8x128xf32>
    %195 = math.exp %194 : vector<8x128xf32>
    %cst_38 = arith.constant 1.000000e+00 : f32
    %196 = vector.broadcast %cst_38 : f32 to vector<8x128xf32>
    %197 = arith.addf %196, %195 : vector<8x128xf32>
    %198 = arith.divf %196, %197 : vector<8x128xf32>
    %199 = math.tanh %188 : vector<8x128xf32>
    %200 = arith.select %11, %198, %199 : vector<8x128xi1>, vector<8x128xf32>
    %201 = vector.extract_strided_slice %193 {offsets = [0, 0], sizes = [8, 64], strides = [1, 1]} : vector<8x128xf32> to vector<8x64xf32>
    %202 = vector.extract_strided_slice %193 {offsets = [0, 64], sizes = [8, 64], strides = [1, 1]} : vector<8x128xf32> to vector<8x64xf32>
    %203 = vector.extract_strided_slice %200 {offsets = [0, 0], sizes = [8, 64], strides = [1, 1]} : vector<8x128xf32> to vector<8x64xf32>
    %204 = vector.extract_strided_slice %200 {offsets = [0, 64], sizes = [8, 64], strides = [1, 1]} : vector<8x128xf32> to vector<8x64xf32>
    %205 = arith.mulf %202, %179 : vector<8x64xf32>
    %206 = arith.mulf %201, %204 : vector<8x64xf32>
    %207 = arith.addf %205, %206 : vector<8x64xf32>
    %208 = math.tanh %207 : vector<8x64xf32>
    %209 = arith.mulf %203, %208 : vector<8x64xf32>
    %210 = arith.maximumf %182, %209 : vector<8x64xf32>
    %c56 = arith.constant 56 : index
    %c0_39 = arith.constant 0 : index
    %211 = vector.load %arg5[%c56, %c0_39] : memref<64x256xf32, #tpu.memory_space<vmem>>, vector<8x256xf32>
    %212 = arith.truncf %209 : vector<8x64xf32> to vector<8x64xbf16>
    %cst_40 = arith.constant dense<0.000000e+00> : vector<8x256xf32>
    %213 = tpu.matmul %212, %1, %cst_40 {dimension_numbers = #tpu.dot_dimension_numbers<[1], [0], [0], [1], [0, 0, 1, 1], [], []>} : vector<8x64xbf16>, vector<64x256xbf16>, vector<8x256xf32> -> vector<8x256xf32>
    %214 = arith.addf %211, %213 : vector<8x256xf32>
    %215 = vector.extract_strided_slice %214 {offsets = [0, 0], sizes = [8, 128], strides = [1, 1]} : vector<8x256xf32> to vector<8x128xf32>
    %216 = vector.extract_strided_slice %214 {offsets = [0, 128], sizes = [8, 128], strides = [1, 1]} : vector<8x256xf32> to vector<8x128xf32>
    %217 = arith.negf %215 : vector<8x128xf32>
    %218 = math.exp %217 : vector<8x128xf32>
    %cst_41 = arith.constant 1.000000e+00 : f32
    %219 = vector.broadcast %cst_41 : f32 to vector<8x128xf32>
    %220 = arith.addf %219, %218 : vector<8x128xf32>
    %221 = arith.divf %219, %220 : vector<8x128xf32>
    %222 = arith.negf %216 : vector<8x128xf32>
    %223 = math.exp %222 : vector<8x128xf32>
    %cst_42 = arith.constant 1.000000e+00 : f32
    %224 = vector.broadcast %cst_42 : f32 to vector<8x128xf32>
    %225 = arith.addf %224, %223 : vector<8x128xf32>
    %226 = arith.divf %224, %225 : vector<8x128xf32>
    %227 = math.tanh %216 : vector<8x128xf32>
    %228 = arith.select %11, %226, %227 : vector<8x128xi1>, vector<8x128xf32>
    %229 = vector.extract_strided_slice %221 {offsets = [0, 0], sizes = [8, 64], strides = [1, 1]} : vector<8x128xf32> to vector<8x64xf32>
    %230 = vector.extract_strided_slice %221 {offsets = [0, 64], sizes = [8, 64], strides = [1, 1]} : vector<8x128xf32> to vector<8x64xf32>
    %231 = vector.extract_strided_slice %228 {offsets = [0, 0], sizes = [8, 64], strides = [1, 1]} : vector<8x128xf32> to vector<8x64xf32>
    %232 = vector.extract_strided_slice %228 {offsets = [0, 64], sizes = [8, 64], strides = [1, 1]} : vector<8x128xf32> to vector<8x64xf32>
    %233 = arith.mulf %230, %207 : vector<8x64xf32>
    %234 = arith.mulf %229, %232 : vector<8x64xf32>
    %235 = arith.addf %233, %234 : vector<8x64xf32>
    %236 = math.tanh %235 : vector<8x64xf32>
    %237 = arith.mulf %231, %236 : vector<8x64xf32>
    %238 = arith.maximumf %210, %237 : vector<8x64xf32>
    %239 = vector.extract_strided_slice %238 {offsets = [0, 0], sizes = [2, 64], strides = [1, 1]} : vector<8x64xf32> to vector<2x64xf32>
    %240 = vector.extract_strided_slice %238 {offsets = [2, 0], sizes = [2, 64], strides = [1, 1]} : vector<8x64xf32> to vector<2x64xf32>
    %241 = arith.subf %239, %240 : vector<2x64xf32>
    %242 = math.absf %241 : vector<2x64xf32>
    %243 = arith.mulf %239, %240 : vector<2x64xf32>
    %244 = tpu.concatenate %239, %240, %242, %243 in 1 : vector<2x64xf32>, vector<2x64xf32>, vector<2x64xf32>, vector<2x64xf32> -> vector<2x256xf32>
    %c0_43 = arith.constant 0 : index
    %c0_44 = arith.constant 0 : index
    %245 = vector.load %arg2[%c0_43, %c0_44] : memref<512x128xbf16, #tpu.memory_space<vmem>>, vector<256x128xbf16>
    %c256 = arith.constant 256 : index
    %c0_45 = arith.constant 0 : index
    %246 = vector.load %arg2[%c256, %c0_45] : memref<512x128xbf16, #tpu.memory_space<vmem>>, vector<128x128xbf16>
    %c384 = arith.constant 384 : index
    %c0_46 = arith.constant 0 : index
    %247 = vector.load %arg2[%c384, %c0_46] : memref<512x128xbf16, #tpu.memory_space<vmem>>, vector<128x128xbf16>
    %c0_47 = arith.constant 0 : index
    %c0_48 = arith.constant 0 : index
    %248 = vector.load %arg3[%c0_47, %c0_48] : memref<8x128xf32, #tpu.memory_space<vmem>>, vector<8x128xf32>
    %249 = arith.truncf %244 : vector<2x256xf32> to vector<2x256xbf16>
    %cst_49 = arith.constant dense<0.000000e+00> : vector<2x128xf32>
    %250 = tpu.matmul %249, %245, %cst_49 {dimension_numbers = #tpu.dot_dimension_numbers<[1], [0], [0], [1], [0, 0, 1, 1], [], []>} : vector<2x256xbf16>, vector<256x128xbf16>, vector<2x128xf32> -> vector<2x128xf32>
    %251 = vector.extract_strided_slice %248 {offsets = [0, 0], sizes = [1, 128], strides = [1, 1]} : vector<8x128xf32> to vector<1x128xf32>
    %252 = vector.broadcast %251 : vector<1x128xf32> to vector<2x128xf32>
    %253 = arith.addf %250, %252 : vector<2x128xf32>
    %254 = math.tanh %253 : vector<2x128xf32>
    %255 = arith.truncf %254 : vector<2x128xf32> to vector<2x128xbf16>
    %cst_50 = arith.constant dense<0.000000e+00> : vector<2x128xf32>
    %256 = tpu.matmul %255, %246, %cst_50 {dimension_numbers = #tpu.dot_dimension_numbers<[1], [0], [0], [1], [0, 0, 1, 1], [], []>} : vector<2x128xbf16>, vector<128x128xbf16>, vector<2x128xf32> -> vector<2x128xf32>
    %257 = vector.extract_strided_slice %248 {offsets = [1, 0], sizes = [1, 128], strides = [1, 1]} : vector<8x128xf32> to vector<1x128xf32>
    %258 = vector.broadcast %257 : vector<1x128xf32> to vector<2x128xf32>
    %259 = arith.addf %256, %258 : vector<2x128xf32>
    %260 = math.tanh %259 : vector<2x128xf32>
    %261 = arith.truncf %260 : vector<2x128xf32> to vector<2x128xbf16>
    %cst_51 = arith.constant dense<0.000000e+00> : vector<2x128xf32>
    %262 = tpu.matmul %261, %247, %cst_51 {dimension_numbers = #tpu.dot_dimension_numbers<[1], [0], [0], [1], [0, 0, 1, 1], [], []>} : vector<2x128xbf16>, vector<128x128xbf16>, vector<2x128xf32> -> vector<2x128xf32>
    %263 = vector.extract_strided_slice %248 {offsets = [2, 0], sizes = [1, 128], strides = [1, 1]} : vector<8x128xf32> to vector<1x128xf32>
    %264 = vector.broadcast %263 : vector<1x128xf32> to vector<2x128xf32>
    %265 = arith.addf %262, %264 : vector<2x128xf32>
    %c0_52 = arith.constant 0 : index
    %c0_53 = arith.constant 0 : index
    %266 = vector.load %arg4[%c0_52, %c0_53] : memref<2x128xf32, #tpu.memory_space<vmem>>, vector<2x128xf32>
    tpu.vector_store %arg4[%c0_52, %c0_53], %265 {strides = array<i32>} : memref<2x128xf32, #tpu.memory_space<vmem>>, vector<2x128xf32>,
    return
  }
}

</mosaic_0001>

<llo_original>
// kernel: nlinet_forward.1
$region0: #{nlinet_forward.1}
  #allocation0 [shape = 'u32[]', space=smem, size = 0x4, offset = 0x4, fixed_abs, tag = 'smem constant byte address 0x4 - core index']
  #allocation1 [shape = 'u32[72,128]{1,0:T(1,128)}', space=vmem, size = 0x9000, scoped, tag = 'internal scratch']
  #allocation2 [shape = 'f32[64,256]{1,0:T(8,128)}', space=vmem, size = 0x10000, scoped, tag = 'scratch operand']
  %s0 = inlined_call_operand.vmem [shape: bf16[64,64], index: 0, kind: input, shape index: {}]
  %s1 = inlined_call_operand.vmem [shape: bf16[136,256], index: 1, kind: input, shape index: {}]
  %s2 = inlined_call_operand.hbm [shape: bf16[512,128], index: 2, kind: input, shape index: {}]
  %s3 = inlined_call_operand.vmem [shape: f32[8,128], index: 3, kind: input, shape index: {}]
  %s4 = inlined_call_operand.hbm [shape: f32[2,128], index: 4, kind: output, shape index: {}]
  %s5 = sld [smem:[#allocation0]]
  $region30: #{nlinet_forward.1} parent=0
    _
  %s7 = ssub.s32 1, %s5
  %s8 = scalar_select 0, %s7, %s5
  $region1: #{nlinet_forward.1} parent=0
    #allocation3 [shape = 'u8[131072]{0}', space=vmem, size = 0x20000, scoped, tag = 'input window, operand 2, single buffered']
    #allocation4 [shape = 's32[1]{0}', space=sflag, size = 0x4, scoped, tag = 'scoped memory for nlinet_forward.1']
    #allocation5 [shape = 's32[1]{0}', space=sflag, size = 0x4, scoped, tag = 'scoped memory for nlinet_forward.1']
    #allocation6 [shape = 'u8[1024]{0}', space=vmem, size = 0x400, scoped, tag = 'output window, operand 0, single buffered']
    %9 = vsyncpa [#allocation4], 0
    %10 = vsyncpa [#allocation5], 0
    // Predicated region
    $region2: #{nlinet_forward.1} parent=1 // pred_check
      _
    $region3: #{nlinet_forward.1} parent=1 // pred_check_branch
      %12 = sbr.rel (0) target = $region5
    $region4: #{nlinet_forward.1} parent=1 // pred_region
      _
    $region5: #{nlinet_forward.1} parent=1 // pred_fallthru
      _
    // Predicated region
    $region6: #{nlinet_forward.1} parent=1 // pred_check
      _
    $region7: #{nlinet_forward.1} parent=1 // pred_check_branch
      %14 = sbr.rel (0) target = $region9
    $region8: #{nlinet_forward.1} parent=1 // pred_region
      _
    $region9: #{nlinet_forward.1} parent=1 // pred_fallthru
      _
    // Predicated region
    $region10: #{nlinet_forward.1} parent=1 // pred_check
      _
    $region11: #{nlinet_forward.1} parent=1 // pred_check_branch
      %16 = sbr.rel (0) target = $region13
    $region12: #{nlinet_forward.1} parent=1 // pred_region
      %18 = vsyncadd [#allocation4], 0
      %s19 = sshll.u32 %s2, 4
      %s20 = int_to_ptr.hbm [resolvable:$true] %s19
      %s21 = sshll.u32 [#allocation3], 4
      %s22 = int_to_ptr.vmem [resolvable:$true] %s21
      %27 = dma.hbm_to_vmem [thread:$0]  %s20, 4096, %s22, [#allocation4], 64, 64, 4
    $region13: #{nlinet_forward.1} parent=1 // pred_fallthru
      _
    // Predicated region
    $region14: #{nlinet_forward.1} parent=1 // pred_check
      _
    $region15: #{nlinet_forward.1} parent=1 // pred_check_branch
      %29 = sbr.rel (0) target = $region17
    $region16: #{nlinet_forward.1} parent=1 // pred_region
      _
    $region17: #{nlinet_forward.1} parent=1 // pred_fallthru
      _
    // Predicated region
    $region18: #{nlinet_forward.1} parent=1 // pred_check
      _
    $region19: #{nlinet_forward.1} parent=1 // pred_check_branch
      %31 = sbr.rel (0) target = $region21
    $region20: #{nlinet_forward.1} parent=1 // pred_region
      %33 = dma.done [#allocation4], 4096
    $region21: #{nlinet_forward.1} parent=1 // pred_fallthru
      _
    %v35 = vld [vmem:[%s1] sm:$0xff]
    %v36 = vld [vmem:[%s1 + $0x8] sm:$0xff]
    %v37 = vld [vmem:[%s1 + $0x10] sm:$0xff]
    %v38 = vld [vmem:[%s1 + $0x18] sm:$0xff]
    %v39 = vld [vmem:[%s1 + $0x20] sm:$0xff]
    %v40 = vld [vmem:[%s1 + $0x28] sm:$0xff]
    %v41 = vld [vmem:[%s1 + $0x30] sm:$0xff]
    %v42 = vld [vmem:[%s1 + $0x38] sm:$0xff]
    %v43 = vld [vmem:[%s1 + $0x40] sm:$0xff]
    %v44 = vld [vmem:[%s1 + $0x48] sm:$0xff]
    %v45 = vld [vmem:[%s1 + $0x50] sm:$0xff]
    %v46 = vld [vmem:[%s1 + $0x58] sm:$0xff]
    %v47 = vld [vmem:[%s1 + $0x60] sm:$0xff]
    %v48 = vld [vmem:[%s1 + $0x68] sm:$0xff]
    %v49 = vld [vmem:[%s1 + $0x70] sm:$0xff]
    %v50 = vld [vmem:[%s1 + $0x78] sm:$0xff]
    %v51 = vld [vmem:[%s1 + $0x80] sm:$0x11]
    %v52 = vunpack.c.l.bf16 %v51
    %v53 = vunpack.c.h.bf16 %v51
    %v54 = vld [vmem:[%s0] sm:$0xf]
    %v55 = vld [vmem:[%s0 + $0x4] sm:$0xf]
    %v56 = vld [vmem:[%s0 + $0x8] sm:$0xf]
    %v57 = vld [vmem:[%s0 + $0xc] sm:$0xf]
    %v58 = vld [vmem:[%s0 + $0x10] sm:$0xf]
    %v59 = vld [vmem:[%s0 + $0x14] sm:$0xf]
    %v60 = vld [vmem:[%s0 + $0x18] sm:$0xf]
    %v61 = vld [vmem:[%s0 + $0x1c] sm:$0xf]
    %v62 = vperm.slane %v52, 0
    %v63 = vperm.slane %v53, 0
    %v72 = vunpack.c.l.b16 %v54
    %v73 = vunpack.c.l.b16 %v55
    %v74 = vunpack.c.l.b16 %v56
    %v75 = vunpack.c.l.b16 %v57
    %v76 = vunpack.c.l.b16 %v58
    %v77 = vunpack.c.l.b16 %v59
    %v78 = vunpack.c.l.b16 %v60
    %v79 = vunpack.c.l.b16 %v61
    %v80 = vpack.c.b16 %v73, %v72
    %v81 = vpack.c.b16 %v75, %v74
    %v82 = vpack.c.b16 %v77, %v76
    %v83 = vpack.c.b16 %v79, %v78
    %v92 = vunpack.c.l.b16 %v35
    %v93 = vunpack.c.h.b16 %v35
    %v94 = vunpack.c.l.b16 %v36
    %v95 = vunpack.c.h.b16 %v36
    %v96 = vunpack.c.l.b16 %v37
    %v97 = vunpack.c.h.b16 %v37
    %v98 = vunpack.c.l.b16 %v38
    %v99 = vunpack.c.h.b16 %v38
    %v100 = vunpack.c.l.b16 %v39
    %v101 = vunpack.c.h.b16 %v39
    %v102 = vunpack.c.l.b16 %v40
    %v103 = vunpack.c.h.b16 %v40
    %v104 = vunpack.c.l.b16 %v41
    %v105 = vunpack.c.h.b16 %v41
    %v106 = vunpack.c.l.b16 %v42
    %v107 = vunpack.c.h.b16 %v42
    %v108 = vpack.c.b16 %v94, %v92
    %v109 = vpack.c.b16 %v95, %v93
    %v110 = vpack.c.b16 %v98, %v96
    %v111 = vpack.c.b16 %v99, %v97
    %v112 = vpack.c.b16 %v102, %v100
    %v113 = vpack.c.b16 %v103, %v101
    %v114 = vpack.c.b16 %v106, %v104
    %v115 = vpack.c.b16 %v107, %v105
    %vm124 = vcmask 523264
    %v126 = vsel %vm124, %v80, 0
    %v129 = vsel %vm124, %v81, 0
    %v132 = vsel %vm124, %v82, 0
    %v135 = vsel %vm124, %v83, 0
    %137 = vmatpush.bf16.msra.mxu0 0
    %138 = vmatpush.bf16.msra.mxu0 0
    %139 = vmatpush.bf16.msra.mxu0 0
    %140 = vmatpush.bf16.msra.mxu0 0
    %141 = vmatpush.bf16.msra.mxu0 %v114
    %142 = vmatpush.bf16.msra.mxu0 %v112
    %143 = vmatpush.bf16.msra.mxu0 %v110
    %144 = vmatpush.bf16.msra.mxu0 %v108
    %145 = vmatmul.bf16.gmra.mxu0 %v126
    %v146 = vpop.f32.mrf.mxu0
    %v147 = vadd.f32 %v62, %v146
    %v148 = vpop.f32.mrf.mxu0
    %v149 = vadd.f32 %v62, %v148
    %150 = vmatmul.bf16.gmra.mxu0 %v129
    %v151 = vpop.f32.mrf.mxu0
    %v152 = vadd.f32 %v62, %v151
    %v153 = vpop.f32.mrf.mxu0
    %v154 = vadd.f32 %v62, %v153
    %155 = vmatmul.bf16.gmra.mxu0 %v132
    %v156 = vpop.f32.mrf.mxu0
    %v157 = vadd.f32 %v62, %v156
    %v158 = vpop.f32.mrf.mxu0
    %v159 = vadd.f32 %v62, %v158
    %160 = vmatmul.bf16.gmra.mxu0 %v135
    %v161 = vpop.f32.mrf.mxu0
    %v162 = vadd.f32 %v62, %v161
    %v163 = vpop.f32.mrf.mxu0
    %v164 = vadd.f32 %v62, %v163
    %165 = vdwg.mxu0
    %166 = vmatpush.bf16.msra.mxu0 0
    %167 = vmatpush.bf16.msra.mxu0 0
    %168 = vmatpush.bf16.msra.mxu0 0
    %169 = vmatpush.bf16.msra.mxu0 0
    %170 = vmatpush.bf16.msra.mxu0 %v115
    %171 = vmatpush.bf16.msra.mxu0 %v113
    %172 = vmatpush.bf16.msra.mxu0 %v111
    %173 = vmatpush.bf16.msra.mxu0 %v109
    %174 = vmatmul.bf16.gmra.mxu0 %v126
    %v175 = vpop.f32.mrf.mxu0
    %v176 = vadd.f32 %v63, %v175
    %v177 = vpop.f32.mrf.mxu0
    %v178 = vadd.f32 %v63, %v177
    %179 = vmatmul.bf16.gmra.mxu0 %v129
    %v180 = vpop.f32.mrf.mxu0
    %v181 = vadd.f32 %v63, %v180
    %v182 = vpop.f32.mrf.mxu0
    %v183 = vadd.f32 %v63, %v182
    %184 = vmatmul.bf16.gmra.mxu0 %v132
    %v185 = vpop.f32.mrf.mxu0
    %v186 = vadd.f32 %v63, %v185
    %v187 = vpop.f32.mrf.mxu0
    %v188 = vadd.f32 %v63, %v187
    %189 = vmatmul.bf16.gmra.mxu0 %v135
    %v190 = vpop.f32.mrf.mxu0
    %v191 = vadd.f32 %v63, %v190
    %v192 = vpop.f32.mrf.mxu0
    %v193 = vadd.f32 %v63, %v192
    %194 = vdwg.mxu0
    %195 = vst [vmem:[#allocation2] sm:$0xff] %v147
    %196 = vst [vmem:[#allocation2 + $0x8] sm:$0xff] %v176
    %197 = vst [vmem:[#allocation2 + $0x10] sm:$0xff] %v149
    %198 = vst [vmem:[#allocation2 + $0x18] sm:$0xff] %v178
    %199 = vst [vmem:[#allocation2 + $0x20] sm:$0xff] %v152
    %200 = vst [vmem:[#allocation2 + $0x28] sm:$0xff] %v181
    %201 = vst [vmem:[#allocation2 + $0x30] sm:$0xff] %v154
    %202 = vst [vmem:[#allocation2 + $0x38] sm:$0xff] %v183
    %203 = vst [vmem:[#allocation2 + $0x40] sm:$0xff] %v157
    %204 = vst [vmem:[#allocation2 + $0x48] sm:$0xff] %v186
    %205 = vst [vmem:[#allocation2 + $0x50] sm:$0xff] %v159
    %206 = vst [vmem:[#allocation2 + $0x58] sm:$0xff] %v188
    %207 = vst [vmem:[#allocation2 + $0x60] sm:$0xff] %v162
    %208 = vst [vmem:[#allocation2 + $0x68] sm:$0xff] %v191
    %209 = vst [vmem:[#allocation2 + $0x70] sm:$0xff] %v164
    %210 = vst [vmem:[#allocation2 + $0x78] sm:$0xff] %v193
    %v211 = vlaneseq
    %v212 = vand.u32 %v211, 127
    %vm213 = vcmp.lt.s32.totalorder %v212, 64
    %v214 = vld [vmem:[#allocation2] sm:$0xff]
    %v215 = vld [vmem:[#allocation2 + $0x8] sm:$0xff]
    %v224 = vunpack.c.l.b16 %v43
    %v225 = vunpack.c.h.b16 %v43
    %v226 = vunpack.c.l.b16 %v44
    %v227 = vunpack.c.h.b16 %v44
    %v228 = vunpack.c.l.b16 %v45
    %v229 = vunpack.c.h.b16 %v45
    %v230 = vunpack.c.l.b16 %v46
    %v231 = vunpack.c.h.b16 %v46
    %v232 = vunpack.c.l.b16 %v47
    %v233 = vunpack.c.h.b16 %v47
    %v234 = vunpack.c.l.b16 %v48
    %v235 = vunpack.c.h.b16 %v48
    %v236 = vunpack.c.l.b16 %v49
    %v237 = vunpack.c.h.b16 %v49
    %v238 = vunpack.c.l.b16 %v50
    %v239 = vunpack.c.h.b16 %v50
    %v240 = vpack.c.b16 %v226, %v224
    %v241 = vpack.c.b16 %v227, %v225
    %v242 = vpack.c.b16 %v230, %v228
    %v243 = vpack.c.b16 %v231, %v229
    %v244 = vpack.c.b16 %v234, %v232
    %v245 = vpack.c.b16 %v235, %v233
    %v246 = vpack.c.b16 %v238, %v236
    %v247 = vpack.c.b16 %v239, %v237
    %v257 = vsel %vm124, 0, 0
    %259 = vmatpush.bf16.msra.mxu0 0
    %260 = vmatpush.bf16.msra.mxu0 0
    %261 = vmatpush.bf16.msra.mxu0 0
    %262 = vmatpush.bf16.msra.mxu0 0
    %263 = vmatpush.bf16.msra.mxu0 %v246
    %264 = vmatpush.bf16.msra.mxu0 %v244
    %265 = vmatpush.bf16.msra.mxu0 %v242
    %266 = vmatpush.bf16.msra.mxu0 %v240
    %267 = vmatmul.bf16.gmra.mxu0 %v257
    %v268 = vpop.f32.mrf.mxu0
    %v269 = vadd.f32 0.0, %v268
    %v270 = vpop.f32.mrf.mxu0
    %271 = vdwg.mxu0
    %272 = vmatpush.bf16.msra.mxu0 0
    %273 = vmatpush.bf16.msra.mxu0 0
    %274 = vmatpush.bf16.msra.mxu0 0
    %275 = vmatpush.bf16.msra.mxu0 0
    %276 = vmatpush.bf16.msra.mxu0 %v247
    %277 = vmatpush.bf16.msra.mxu0 %v245
    %278 = vmatpush.bf16.msra.mxu0 %v243
    %279 = vmatpush.bf16.msra.mxu0 %v241
    %280 = vmatmul.bf16.gmra.mxu0 %v257
    %v281 = vpop.f32.mrf.mxu0
    %v282 = vadd.f32 0.0, %v281
    %v283 = vpop.f32.mrf.mxu0
    %284 = vdwg.mxu0
    %v285 = vadd.f32 %v214, %v269
    %v286 = vadd.f32 %v215, %v282
    %v287 = vxor.u32 %v285, 2147483648
    %v288 = vmul.f32 %v287, 1.442695
    %v289 = vpow.pop %v288
    %v290 = vadd.f32 %v289, 1.0
    %v291 = vrcp.pop %v290
    %v292 = vmul.f32 %v290, %v291
    %v293 = vsub.f32 1.0, %v292
    %v294 = vmul.f32 %v291, %v293
    %v295 = vadd.f32 %v291, %v294
    %vm296 = vweird.f32 %v290
    %vm297 = vweird.f32 %v291
    %vm298 = vmor %vm296, %vm297
    %v299 = vsel %vm298, %v291, %v295
    %v300 = vand.u32 2147483647, %v290
    %vm301 = vcmp.eq.f32.partialorder %v300, 8.507059e+37
    %v302 = vand.u32 %v290, 2147483648
    %v303 = vor.u32 1.1754944e-38, %v302
    %v304 = vsel %vm301, %v303, %v299
    %v305 = vmul.f32 1.0, %v304
    %v306 = vxor.u32 %v286, 2147483648
    %v307 = vmul.f32 %v306, 1.442695
    %v308 = vpow.pop %v307
    %v309 = vadd.f32 %v308, 1.0
    %v310 = vrcp.pop %v309
    %v311 = vmul.f32 %v309, %v310
    %v312 = vsub.f32 1.0, %v311
    %v313 = vmul.f32 %v310, %v312
    %v314 = vadd.f32 %v310, %v313
    %vm315 = vweird.f32 %v309
    %vm316 = vweird.f32 %v310
    %vm317 = vmor %vm315, %vm316
    %v318 = vsel %vm317, %v310, %v314
    %v319 = vand.u32 2147483647, %v309
    %vm320 = vcmp.eq.f32.partialorder %v319, 8.507059e+37
    %v321 = vand.u32 %v309, 2147483648
    %v322 = vor.u32 1.1754944e-38, %v321
    %v323 = vsel %vm320, %v322, %v318
    %v324 = vmul.f32 1.0, %v323
    %v325 = vtanh.pop %v286
    %v326 = vsel %vm213, %v324, %v325
    %v327 = vmul.f32 %v305, 0.0
    %329 = vrot.lane.b32.xlu0 %v326, 64
    %v330 = vpop.permute.xlu0 %329
    %v332 = vmul.f32 %v305, %v330
    %334 = vrot.lane.b32.xlu0 %v332, 64
    %v335 = vpop.permute.xlu0 %334
    %v337 = vadd.f32 %v327, %v335
    %v338 = vtanh.pop %v337
    %340 = vrot.lane.b32.xlu0 %v338, 64
    %v341 = vpop.permute.xlu0 %340
    %v343 = vmul.f32 %v326, %v341
    %v344 = vld [vmem:[#allocation2 + $0x10] sm:$0xff]
    %v345 = vld [vmem:[#allocation2 + $0x18] sm:$0xff]
    %v346 = vpack.c.bf16 %v343, %v343
    %v348 = vsel %vm124, %v346, 0
    %350 = vmatpush.bf16.msra.mxu0 0
    %351 = vmatpush.bf16.msra.mxu0 0
    %352 = vmatpush.bf16.msra.mxu0 0
    %353 = vmatpush.bf16.msra.mxu0 0
    %354 = vmatpush.bf16.msra.mxu0 %v246
    %355 = vmatpush.bf16.msra.mxu0 %v244
    %356 = vmatpush.bf16.msra.mxu0 %v242
    %357 = vmatpush.bf16.msra.mxu0 %v240
    %358 = vmatmul.bf16.gmra.mxu0 %v348
    %v359 = vpop.f32.mrf.mxu0
    %v360 = vadd.f32 0.0, %v359
    %v361 = vpop.f32.mrf.mxu0
    %362 = vdwg.mxu0
    %363 = vmatpush.bf16.msra.mxu0 0
    %364 = vmatpush.bf16.msra.mxu0 0
    %365 = vmatpush.bf16.msra.mxu0 0
    %366 = vmatpush.bf16.msra.mxu0 0
    %367 = vmatpush.bf16.msra.mxu0 %v247
    %368 = vmatpush.bf16.msra.mxu0 %v245
    %369 = vmatpush.bf16.msra.mxu0 %v243
    %370 = vmatpush.bf16.msra.mxu0 %v241
    %371 = vmatmul.bf16.gmra.mxu0 %v348
    %v372 = vpop.f32.mrf.mxu0
    %v373 = vadd.f32 0.0, %v372
    %v374 = vpop.f32.mrf.mxu0
    %375 = vdwg.mxu0
    %v376 = vadd.f32 %v344, %v360
    %v377 = vadd.f32 %v345, %v373
    %v378 = vxor.u32 %v376, 2147483648
    %v379 = vmul.f32 %v378, 1.442695
    %v380 = vpow.pop %v379
    %v381 = vadd.f32 %v380, 1.0
    %v382 = vrcp.pop %v381
    %v383 = vmul.f32 %v381, %v382
    %v384 = vsub.f32 1.0, %v383
    %v385 = vmul.f32 %v382, %v384
    %v386 = vadd.f32 %v382, %v385
    %vm387 = vweird.f32 %v381
    %vm388 = vweird.f32 %v382
    %vm389 = vmor %vm387, %vm388
    %v390 = vsel %vm389, %v382, %v386
    %v391 = vand.u32 2147483647, %v381
    %vm392 = vcmp.eq.f32.partialorder %v391, 8.507059e+37
    %v393 = vand.u32 %v381, 2147483648
    %v394 = vor.u32 1.1754944e-38, %v393
    %v395 = vsel %vm392, %v394, %v390
    %v396 = vmul.f32 1.0, %v395
    %v397 = vxor.u32 %v377, 2147483648
    %v398 = vmul.f32 %v397, 1.442695
    %v399 = vpow.pop %v398
    %v400 = vadd.f32 %v399, 1.0
    %v401 = vrcp.pop %v400
    %v402 = vmul.f32 %v400, %v401
    %v403 = vsub.f32 1.0, %v402
    %v404 = vmul.f32 %v401, %v403
    %v405 = vadd.f32 %v401, %v404
    %vm406 = vweird.f32 %v400
    %vm407 = vweird.f32 %v401
    %vm408 = vmor %vm406, %vm407
    %v409 = vsel %vm408, %v401, %v405
    %v410 = vand.u32 2147483647, %v400
    %vm411 = vcmp.eq.f32.partialorder %v410, 8.507059e+37
    %v412 = vand.u32 %v400, 2147483648
    %v413 = vor.u32 1.1754944e-38, %v412
    %v414 = vsel %vm411, %v413, %v409
    %v415 = vmul.f32 1.0, %v414
    %v416 = vtanh.pop %v377
    %v417 = vsel %vm213, %v415, %v416
    %v418 = vmul.f32 %v396, %v337
    %420 = vrot.lane.b32.xlu0 %v417, 64
    %v421 = vpop.permute.xlu0 %420
    %v423 = vmul.f32 %v396, %v421
    %425 = vrot.lane.b32.xlu0 %v423, 64
    %v426 = vpop.permute.xlu0 %425
    %v428 = vadd.f32 %v418, %v426
    %v429 = vtanh.pop %v428
    %431 = vrot.lane.b32.xlu0 %v429, 64
    %v432 = vpop.permute.xlu0 %431
    %v434 = vmul.f32 %v417, %v432
    %v435 = vmax.f32 %v343, %v434
    %v436 = vld [vmem:[#allocation2 + $0x20] sm:$0xff]
    %v437 = vld [vmem:[#allocation2 + $0x28] sm:$0xff]
    %v438 = vpack.c.bf16 %v434, %v434
    %v440 = vsel %vm124, %v438, 0
    %442 = vmatpush.bf16.msra.mxu0 0
    %443 = vmatpush.bf16.msra.mxu0 0
    %444 = vmatpush.bf16.msra.mxu0 0
    %445 = vmatpush.bf16.msra.mxu0 0
    %446 = vmatpush.bf16.msra.mxu0 %v246
    %447 = vmatpush.bf16.msra.mxu0 %v244
    %448 = vmatpush.bf16.msra.mxu0 %v242
    %449 = vmatpush.bf16.msra.mxu0 %v240
    %450 = vmatmul.bf16.gmra.mxu0 %v440
    %v451 = vpop.f32.mrf.mxu0
    %v452 = vadd.f32 0.0, %v451
    %v453 = vpop.f32.mrf.mxu0
    %454 = vdwg.mxu0
    %455 = vmatpush.bf16.msra.mxu0 0
    %456 = vmatpush.bf16.msra.mxu0 0
    %457 = vmatpush.bf16.msra.mxu0 0
    %458 = vmatpush.bf16.msra.mxu0 0
    %459 = vmatpush.bf16.msra.mxu0 %v247
    %460 = vmatpush.bf16.msra.mxu0 %v245
    %461 = vmatpush.bf16.msra.mxu0 %v243
    %462 = vmatpush.bf16.msra.mxu0 %v241
    %463 = vmatmul.bf16.gmra.mxu0 %v440
    %v464 = vpop.f32.mrf.mxu0
    %v465 = vadd.f32 0.0, %v464
    %v466 = vpop.f32.mrf.mxu0
    %467 = vdwg.mxu0
    %v468 = vadd.f32 %v436, %v452
    %v469 = vadd.f32 %v437, %v465
    %v470 = vxor.u32 %v468, 2147483648
    %v471 = vmul.f32 %v470, 1.442695
    %v472 = vpow.pop %v471
    %v473 = vadd.f32 %v472, 1.0
    %v474 = vrcp.pop %v473
    %v475 = vmul.f32 %v473, %v474
    %v476 = vsub.f32 1.0, %v475
    %v477 = vmul.f32 %v474, %v476
    %v478 = vadd.f32 %v474, %v477
    %vm479 = vweird.f32 %v473
    %vm480 = vweird.f32 %v474
    %vm481 = vmor %vm479, %vm480
    %v482 = vsel %vm481, %v474, %v478
    %v483 = vand.u32 2147483647, %v473
    %vm484 = vcmp.eq.f32.partialorder %v483, 8.507059e+37
    %v485 = vand.u32 %v473, 2147483648
    %v486 = vor.u32 1.1754944e-38, %v485
    %v487 = vsel %vm484, %v486, %v482
    %v488 = vmul.f32 1.0, %v487
    %v489 = vxor.u32 %v469, 2147483648
    %v490 = vmul.f32 %v489, 1.442695
    %v491 = vpow.pop %v490
    %v492 = vadd.f32 %v491, 1.0
    %v493 = vrcp.pop %v492
    %v494 = vmul.f32 %v492, %v493
    %v495 = vsub.f32 1.0, %v494
    %v496 = vmul.f32 %v493, %v495
    %v497 = vadd.f32 %v493, %v496
    %vm498 = vweird.f32 %v492
    %vm499 = vweird.f32 %v493
    %vm500 = vmor %vm498, %vm499
    %v501 = vsel %vm500, %v493, %v497
    %v502 = vand.u32 2147483647, %v492
    %vm503 = vcmp.eq.f32.partialorder %v502, 8.507059e+37
    %v504 = vand.u32 %v492, 2147483648
    %v505 = vor.u32 1.1754944e-38, %v504
    %v506 = vsel %vm503, %v505, %v501
    %v507 = vmul.f32 1.0, %v506
    %v508 = vtanh.pop %v469
    %v509 = vsel %vm213, %v507, %v508
    %v510 = vmul.f32 %v488, %v428
    %512 = vrot.lane.b32.xlu0 %v509, 64
    %v513 = vpop.permute.xlu0 %512
    %v515 = vmul.f32 %v488, %v513
    %517 = vrot.lane.b32.xlu0 %v515, 64
    %v518 = vpop.permute.xlu0 %517
    %v520 = vadd.f32 %v510, %v518
    %v521 = vtanh.pop %v520
    %523 = vrot.lane.b32.xlu0 %v521, 64
    %v524 = vpop.permute.xlu0 %523
    %v526 = vmul.f32 %v509, %v524
    %v527 = vmax.f32 %v435, %v526
    %v528 = vld [vmem:[#allocation2 + $0x30] sm:$0xff]
    %v529 = vld [vmem:[#allocation2 + $0x38] sm:$0xff]
    %v530 = vpack.c.bf16 %v526, %v526
    %v532 = vsel %vm124, %v530, 0
    %534 = vmatpush.bf16.msra.mxu0 0
    %535 = vmatpush.bf16.msra.mxu0 0
    %536 = vmatpush.bf16.msra.mxu0 0
    %537 = vmatpush.bf16.msra.mxu0 0
    %538 = vmatpush.bf16.msra.mxu0 %v246
    %539 = vmatpush.bf16.msra.mxu0 %v244
    %540 = vmatpush.bf16.msra.mxu0 %v242
    %541 = vmatpush.bf16.msra.mxu0 %v240
    %542 = vmatmul.bf16.gmra.mxu0 %v532
    %v543 = vpop.f32.mrf.mxu0
    %v544 = vadd.f32 0.0, %v543
    %v545 = vpop.f32.mrf.mxu0
    %546 = vdwg.mxu0
    %547 = vmatpush.bf16.msra.mxu0 0
    %548 = vmatpush.bf16.msra.mxu0 0
    %549 = vmatpush.bf16.msra.mxu0 0
    %550 = vmatpush.bf16.msra.mxu0 0
    %551 = vmatpush.bf16.msra.mxu0 %v247
    %552 = vmatpush.bf16.msra.mxu0 %v245
    %553 = vmatpush.bf16.msra.mxu0 %v243
    %554 = vmatpush.bf16.msra.mxu0 %v241
    %555 = vmatmul.bf16.gmra.mxu0 %v532
    %v556 = vpop.f32.mrf.mxu0
    %v557 = vadd.f32 0.0, %v556
    %v558 = vpop.f32.mrf.mxu0
    %559 = vdwg.mxu0
    %v560 = vadd.f32 %v528, %v544
    %v561 = vadd.f32 %v529, %v557
    %v562 = vxor.u32 %v560, 2147483648
    %v563 = vmul.f32 %v562, 1.442695
    %v564 = vpow.pop %v563
    %v565 = vadd.f32 %v564, 1.0
    %v566 = vrcp.pop %v565
    %v567 = vmul.f32 %v565, %v566
    %v568 = vsub.f32 1.0, %v567
    %v569 = vmul.f32 %v566, %v568
    %v570 = vadd.f32 %v566, %v569
    %vm571 = vweird.f32 %v565
    %vm572 = vweird.f32 %v566
    %vm573 = vmor %vm571, %vm572
    %v574 = vsel %vm573, %v566, %v570
    %v575 = vand.u32 2147483647, %v565
    %vm576 = vcmp.eq.f32.partialorder %v575, 8.507059e+37
    %v577 = vand.u32 %v565, 2147483648
    %v578 = vor.u32 1.1754944e-38, %v577
    %v579 = vsel %vm576, %v578, %v574
    %v580 = vmul.f32 1.0, %v579
    %v581 = vxor.u32 %v561, 2147483648
    %v582 = vmul.f32 %v581, 1.442695
    %v583 = vpow.pop %v582
    %v584 = vadd.f32 %v583, 1.0
    %v585 = vrcp.pop %v584
    %v586 = vmul.f32 %v584, %v585
    %v587 = vsub.f32 1.0, %v586
    %v588 = vmul.f32 %v585, %v587
    %v589 = vadd.f32 %v585, %v588
    %vm590 = vweird.f32 %v584
    %vm591 = vweird.f32 %v585
    %vm592 = vmor %vm590, %vm591
    %v593 = vsel %vm592, %v585, %v589
    %v594 = vand.u32 2147483647, %v584
    %vm595 = vcmp.eq.f32.partialorder %v594, 8.507059e+37
    %v596 = vand.u32 %v584, 2147483648
    %v597 = vor.u32 1.1754944e-38, %v596
    %v598 = vsel %vm595, %v597, %v593
    %v599 = vmul.f32 1.0, %v598
    %v600 = vtanh.pop %v561
    %v601 = vsel %vm213, %v599, %v600
    %v602 = vmul.f32 %v580, %v520
    %604 = vrot.lane.b32.xlu0 %v601, 64
    %v605 = vpop.permute.xlu0 %604
    %v607 = vmul.f32 %v580, %v605
    %609 = vrot.lane.b32.xlu0 %v607, 64
    %v610 = vpop.permute.xlu0 %609
    %v612 = vadd.f32 %v602, %v610
    %v613 = vtanh.pop %v612
    %615 = vrot.lane.b32.xlu0 %v613, 64
    %v616 = vpop.permute.xlu0 %615
    %v618 = vmul.f32 %v601, %v616
    %v619 = vmax.f32 %v527, %v618
    %v620 = vld [vmem:[#allocation2 + $0x40] sm:$0xff]
    %v621 = vld [vmem:[#allocation2 + $0x48] sm:$0xff]
    %v622 = vpack.c.bf16 %v618, %v618
    %v624 = vsel %vm124, %v622, 0
    %626 = vmatpush.bf16.msra.mxu0 0
    %627 = vmatpush.bf16.msra.mxu0 0
    %628 = vmatpush.bf16.msra.mxu0 0
    %629 = vmatpush.bf16.msra.mxu0 0
    %630 = vmatpush.bf16.msra.mxu0 %v246
    %631 = vmatpush.bf16.msra.mxu0 %v244
    %632 = vmatpush.bf16.msra.mxu0 %v242
    %633 = vmatpush.bf16.msra.mxu0 %v240
    %634 = vmatmul.bf16.gmra.mxu0 %v624
    %v635 = vpop.f32.mrf.mxu0
    %v636 = vadd.f32 0.0, %v635
    %v637 = vpop.f32.mrf.mxu0
    %638 = vdwg.mxu0
    %639 = vmatpush.bf16.msra.mxu0 0
    %640 = vmatpush.bf16.msra.mxu0 0
    %641 = vmatpush.bf16.msra.mxu0 0
    %642 = vmatpush.bf16.msra.mxu0 0
    %643 = vmatpush.bf16.msra.mxu0 %v247
    %644 = vmatpush.bf16.msra.mxu0 %v245
    %645 = vmatpush.bf16.msra.mxu0 %v243
    %646 = vmatpush.bf16.msra.mxu0 %v241
    %647 = vmatmul.bf16.gmra.mxu0 %v624
    %v648 = vpop.f32.mrf.mxu0
    %v649 = vadd.f32 0.0, %v648
    %v650 = vpop.f32.mrf.mxu0
    %651 = vdwg.mxu0
    %v652 = vadd.f32 %v620, %v636
    %v653 = vadd.f32 %v621, %v649
    %v654 = vxor.u32 %v652, 2147483648
    %v655 = vmul.f32 %v654, 1.442695
    %v656 = vpow.pop %v655
    %v657 = vadd.f32 %v656, 1.0
    %v658 = vrcp.pop %v657
    %v659 = vmul.f32 %v657, %v658
    %v660 = vsub.f32 1.0, %v659
    %v661 = vmul.f32 %v658, %v660
    %v662 = vadd.f32 %v658, %v661
    %vm663 = vweird.f32 %v657
    %vm664 = vweird.f32 %v658
    %vm665 = vmor %vm663, %vm664
    %v666 = vsel %vm665, %v658, %v662
    %v667 = vand.u32 2147483647, %v657
    %vm668 = vcmp.eq.f32.partialorder %v667, 8.507059e+37
    %v669 = vand.u32 %v657, 2147483648
    %v670 = vor.u32 1.1754944e-38, %v669
    %v671 = vsel %vm668, %v670, %v666
    %v672 = vmul.f32 1.0, %v671
    %v673 = vxor.u32 %v653, 2147483648
    %v674 = vmul.f32 %v673, 1.442695
    %v675 = vpow.pop %v674
    %v676 = vadd.f32 %v675, 1.0
    %v677 = vrcp.pop %v676
    %v678 = vmul.f32 %v676, %v677
    %v679 = vsub.f32 1.0, %v678
    %v680 = vmul.f32 %v677, %v679
    %v681 = vadd.f32 %v677, %v680
    %vm682 = vweird.f32 %v676
    %vm683 = vweird.f32 %v677
    %vm684 = vmor %vm682, %vm683
    %v685 = vsel %vm684, %v677, %v681
    %v686 = vand.u32 2147483647, %v676
    %vm687 = vcmp.eq.f32.partialorder %v686, 8.507059e+37
    %v688 = vand.u32 %v676, 2147483648
    %v689 = vor.u32 1.1754944e-38, %v688
    %v690 = vsel %vm687, %v689, %v685
    %v691 = vmul.f32 1.0, %v690
    %v692 = vtanh.pop %v653
    %v693 = vsel %vm213, %v691, %v692
    %v694 = vmul.f32 %v672, %v612
    %696 = vrot.lane.b32.xlu0 %v693, 64
    %v697 = vpop.permute.xlu0 %696
    %v699 = vmul.f32 %v672, %v697
    %701 = vrot.lane.b32.xlu0 %v699, 64
    %v702 = vpop.permute.xlu0 %701
    %v704 = vadd.f32 %v694, %v702
    %v705 = vtanh.pop %v704
    %707 = vrot.lane.b32.xlu0 %v705, 64
    %v708 = vpop.permute.xlu0 %707
    %v710 = vmul.f32 %v693, %v708
    %v711 = vmax.f32 %v619, %v710
    %v712 = vld [vmem:[#allocation2 + $0x50] sm:$0xff]
    %v713 = vld [vmem:[#allocation2 + $0x58] sm:$0xff]
    %v714 = vpack.c.bf16 %v710, %v710
    %v716 = vsel %vm124, %v714, 0
    %718 = vmatpush.bf16.msra.mxu0 0
    %719 = vmatpush.bf16.msra.mxu0 0
    %720 = vmatpush.bf16.msra.mxu0 0
    %721 = vmatpush.bf16.msra.mxu0 0
    %722 = vmatpush.bf16.msra.mxu0 %v246
    %723 = vmatpush.bf16.msra.mxu0 %v244
    %724 = vmatpush.bf16.msra.mxu0 %v242
    %725 = vmatpush.bf16.msra.mxu0 %v240
    %726 = vmatmul.bf16.gmra.mxu0 %v716
    %v727 = vpop.f32.mrf.mxu0
    %v728 = vadd.f32 0.0, %v727
    %v729 = vpop.f32.mrf.mxu0
    %730 = vdwg.mxu0
    %731 = vmatpush.bf16.msra.mxu0 0
    %732 = vmatpush.bf16.msra.mxu0 0
    %733 = vmatpush.bf16.msra.mxu0 0
    %734 = vmatpush.bf16.msra.mxu0 0
    %735 = vmatpush.bf16.msra.mxu0 %v247
    %736 = vmatpush.bf16.msra.mxu0 %v245
    %737 = vmatpush.bf16.msra.mxu0 %v243
    %738 = vmatpush.bf16.msra.mxu0 %v241
    %739 = vmatmul.bf16.gmra.mxu0 %v716
    %v740 = vpop.f32.mrf.mxu0
    %v741 = vadd.f32 0.0, %v740
    %v742 = vpop.f32.mrf.mxu0
    %743 = vdwg.mxu0
    %v744 = vadd.f32 %v712, %v728
    %v745 = vadd.f32 %v713, %v741
    %v746 = vxor.u32 %v744, 2147483648
    %v747 = vmul.f32 %v746, 1.442695
    %v748 = vpow.pop %v747
    %v749 = vadd.f32 %v748, 1.0
    %v750 = vrcp.pop %v749
    %v751 = vmul.f32 %v749, %v750
    %v752 = vsub.f32 1.0, %v751
    %v753 = vmul.f32 %v750, %v752
    %v754 = vadd.f32 %v750, %v753
    %vm755 = vweird.f32 %v749
    %vm756 = vweird.f32 %v750
    %vm757 = vmor %vm755, %vm756
    %v758 = vsel %vm757, %v750, %v754
    %v759 = vand.u32 2147483647, %v749
    %vm760 = vcmp.eq.f32.partialorder %v759, 8.507059e+37
    %v761 = vand.u32 %v749, 2147483648
    %v762 = vor.u32 1.1754944e-38, %v761
    %v763 = vsel %vm760, %v762, %v758
    %v764 = vmul.f32 1.0, %v763
    %v765 = vxor.u32 %v745, 2147483648
    %v766 = vmul.f32 %v765, 1.442695
    %v767 = vpow.pop %v766
    %v768 = vadd.f32 %v767, 1.0
    %v769 = vrcp.pop %v768
    %v770 = vmul.f32 %v768, %v769
    %v771 = vsub.f32 1.0, %v770
    %v772 = vmul.f32 %v769, %v771
    %v773 = vadd.f32 %v769, %v772
    %vm774 = vweird.f32 %v768
    %vm775 = vweird.f32 %v769
    %vm776 = vmor %vm774, %vm775
    %v777 = vsel %vm776, %v769, %v773
    %v778 = vand.u32 2147483647, %v768
    %vm779 = vcmp.eq.f32.partialorder %v778, 8.507059e+37
    %v780 = vand.u32 %v768, 2147483648
    %v781 = vor.u32 1.1754944e-38, %v780
    %v782 = vsel %vm779, %v781, %v777
    %v783 = vmul.f32 1.0, %v782
    %v784 = vtanh.pop %v745
    %v785 = vsel %vm213, %v783, %v784
    %v786 = vmul.f32 %v764, %v704
    %788 = vrot.lane.b32.xlu0 %v785, 64
    %v789 = vpop.permute.xlu0 %788
    %v791 = vmul.f32 %v764, %v789
    %793 = vrot.lane.b32.xlu0 %v791, 64
    %v794 = vpop.permute.xlu0 %793
    %v796 = vadd.f32 %v786, %v794
    %v797 = vtanh.pop %v796
    %799 = vrot.lane.b32.xlu0 %v797, 64
    %v800 = vpop.permute.xlu0 %799
    %v802 = vmul.f32 %v785, %v800
    %v803 = vmax.f32 %v711, %v802
    %v804 = vld [vmem:[#allocation2 + $0x60] sm:$0xff]
    %v805 = vld [vmem:[#allocation2 + $0x68] sm:$0xff]
    %v806 = vpack.c.bf16 %v802, %v802
    %v808 = vsel %vm124, %v806, 0
    %810 = vmatpush.bf16.msra.mxu0 0
    %811 = vmatpush.bf16.msra.mxu0 0
    %812 = vmatpush.bf16.msra.mxu0 0
    %813 = vmatpush.bf16.msra.mxu0 0
    %814 = vmatpush.bf16.msra.mxu0 %v246
    %815 = vmatpush.bf16.msra.mxu0 %v244
    %816 = vmatpush.bf16.msra.mxu0 %v242
    %817 = vmatpush.bf16.msra.mxu0 %v240
    %818 = vmatmul.bf16.gmra.mxu0 %v808
    %v819 = vpop.f32.mrf.mxu0
    %v820 = vadd.f32 0.0, %v819
    %v821 = vpop.f32.mrf.mxu0
    %822 = vdwg.mxu0
    %823 = vmatpush.bf16.msra.mxu0 0
    %824 = vmatpush.bf16.msra.mxu0 0
    %825 = vmatpush.bf16.msra.mxu0 0
    %826 = vmatpush.bf16.msra.mxu0 0
    %827 = vmatpush.bf16.msra.mxu0 %v247
    %828 = vmatpush.bf16.msra.mxu0 %v245
    %829 = vmatpush.bf16.msra.mxu0 %v243
    %830 = vmatpush.bf16.msra.mxu0 %v241
    %831 = vmatmul.bf16.gmra.mxu0 %v808
    %v832 = vpop.f32.mrf.mxu0
    %v833 = vadd.f32 0.0, %v832
    %v834 = vpop.f32.mrf.mxu0
    %835 = vdwg.mxu0
    %v836 = vadd.f32 %v804, %v820
    %v837 = vadd.f32 %v805, %v833
    %v838 = vxor.u32 %v836, 2147483648
    %v839 = vmul.f32 %v838, 1.442695
    %v840 = vpow.pop %v839
    %v841 = vadd.f32 %v840, 1.0
    %v842 = vrcp.pop %v841
    %v843 = vmul.f32 %v841, %v842
    %v844 = vsub.f32 1.0, %v843
    %v845 = vmul.f32 %v842, %v844
    %v846 = vadd.f32 %v842, %v845
    %vm847 = vweird.f32 %v841
    %vm848 = vweird.f32 %v842
    %vm849 = vmor %vm847, %vm848
    %v850 = vsel %vm849, %v842, %v846
    %v851 = vand.u32 2147483647, %v841
    %vm852 = vcmp.eq.f32.partialorder %v851, 8.507059e+37
    %v853 = vand.u32 %v841, 2147483648
    %v854 = vor.u32 1.1754944e-38, %v853
    %v855 = vsel %vm852, %v854, %v850
    %v856 = vmul.f32 1.0, %v855
    %v857 = vxor.u32 %v837, 2147483648
    %v858 = vmul.f32 %v857, 1.442695
    %v859 = vpow.pop %v858
    %v860 = vadd.f32 %v859, 1.0
    %v861 = vrcp.pop %v860
    %v862 = vmul.f32 %v860, %v861
    %v863 = vsub.f32 1.0, %v862
    %v864 = vmul.f32 %v861, %v863
    %v865 = vadd.f32 %v861, %v864
    %vm866 = vweird.f32 %v860
    %vm867 = vweird.f32 %v861
    %vm868 = vmor %vm866, %vm867
    %v869 = vsel %vm868, %v861, %v865
    %v870 = vand.u32 2147483647, %v860
    %vm871 = vcmp.eq.f32.partialorder %v870, 8.507059e+37
    %v872 = vand.u32 %v860, 2147483648
    %v873 = vor.u32 1.1754944e-38, %v872
    %v874 = vsel %vm871, %v873, %v869
    %v875 = vmul.f32 1.0, %v874
    %v876 = vtanh.pop %v837
    %v877 = vsel %vm213, %v875, %v876
    %v878 = vmul.f32 %v856, %v796
    %880 = vrot.lane.b32.xlu0 %v877, 64
    %v881 = vpop.permute.xlu0 %880
    %v883 = vmul.f32 %v856, %v881
    %885 = vrot.lane.b32.xlu0 %v883, 64
    %v886 = vpop.permute.xlu0 %885
    %v888 = vadd.f32 %v878, %v886
    %v889 = vtanh.pop %v888
    %891 = vrot.lane.b32.xlu0 %v889, 64
    %v892 = vpop.permute.xlu0 %891
    %v894 = vmul.f32 %v877, %v892
    %v895 = vmax.f32 %v803, %v894
    %v896 = vld [vmem:[#allocation2 + $0x70] sm:$0xff]
    %v897 = vld [vmem:[#allocation2 + $0x78] sm:$0xff]
    %v898 = vpack.c.bf16 %v894, %v894
    %v900 = vsel %vm124, %v898, 0
    %902 = vmatpush.bf16.msra.mxu0 0
    %903 = vmatpush.bf16.msra.mxu0 0
    %904 = vmatpush.bf16.msra.mxu0 0
    %905 = vmatpush.bf16.msra.mxu0 0
    %906 = vmatpush.bf16.msra.mxu0 %v246
    %907 = vmatpush.bf16.msra.mxu0 %v244
    %908 = vmatpush.bf16.msra.mxu0 %v242
    %909 = vmatpush.bf16.msra.mxu0 %v240
    %910 = vmatmul.bf16.gmra.mxu0 %v900
    %v911 = vpop.f32.mrf.mxu0
    %v912 = vadd.f32 0.0, %v911
    %v913 = vpop.f32.mrf.mxu0
    %914 = vdwg.mxu0
    %915 = vmatpush.bf16.msra.mxu0 0
    %916 = vmatpush.bf16.msra.mxu0 0
    %917 = vmatpush.bf16.msra.mxu0 0
    %918 = vmatpush.bf16.msra.mxu0 0
    %919 = vmatpush.bf16.msra.mxu0 %v247
    %920 = vmatpush.bf16.msra.mxu0 %v245
    %921 = vmatpush.bf16.msra.mxu0 %v243
    %922 = vmatpush.bf16.msra.mxu0 %v241
    %923 = vmatmul.bf16.gmra.mxu0 %v900
    %v924 = vpop.f32.mrf.mxu0
    %v925 = vadd.f32 0.0, %v924
    %v926 = vpop.f32.mrf.mxu0
    %927 = vdwg.mxu0
    %v928 = vadd.f32 %v896, %v912
    %v929 = vadd.f32 %v897, %v925
    %v930 = vxor.u32 %v928, 2147483648
    %v931 = vmul.f32 %v930, 1.442695
    %v932 = vpow.pop %v931
    %v933 = vadd.f32 %v932, 1.0
    %v934 = vrcp.pop %v933
    %v935 = vmul.f32 %v933, %v934
    %v936 = vsub.f32 1.0, %v935
    %v937 = vmul.f32 %v934, %v936
    %v938 = vadd.f32 %v934, %v937
    %vm939 = vweird.f32 %v933
    %vm940 = vweird.f32 %v934
    %vm941 = vmor %vm939, %vm940
    %v942 = vsel %vm941, %v934, %v938
    %v943 = vand.u32 2147483647, %v933
    %vm944 = vcmp.eq.f32.partialorder %v943, 8.507059e+37
    %v945 = vand.u32 %v933, 2147483648
    %v946 = vor.u32 1.1754944e-38, %v945
    %v947 = vsel %vm944, %v946, %v942
    %v948 = vmul.f32 1.0, %v947
    %v949 = vxor.u32 %v929, 2147483648
    %v950 = vmul.f32 %v949, 1.442695
    %v951 = vpow.pop %v950
    %v952 = vadd.f32 %v951, 1.0
    %v953 = vrcp.pop %v952
    %v954 = vmul.f32 %v952, %v953
    %v955 = vsub.f32 1.0, %v954
    %v956 = vmul.f32 %v953, %v955
    %v957 = vadd.f32 %v953, %v956
    %vm958 = vweird.f32 %v952
    %vm959 = vweird.f32 %v953
    %vm960 = vmor %vm958, %vm959
    %v961 = vsel %vm960, %v953, %v957
    %v962 = vand.u32 2147483647, %v952
    %vm963 = vcmp.eq.f32.partialorder %v962, 8.507059e+37
    %v964 = vand.u32 %v952, 2147483648
    %v965 = vor.u32 1.1754944e-38, %v964
    %v966 = vsel %vm963, %v965, %v961
    %v967 = vmul.f32 1.0, %v966
    %v968 = vtanh.pop %v929
    %v969 = vsel %vm213, %v967, %v968
    %v970 = vmul.f32 %v948, %v888
    %972 = vrot.lane.b32.xlu0 %v969, 64
    %v973 = vpop.permute.xlu0 %972
    %v975 = vmul.f32 %v948, %v973
    %977 = vrot.lane.b32.xlu0 %v975, 64
    %v978 = vpop.permute.xlu0 %977
    %v980 = vadd.f32 %v970, %v978
    %v981 = vtanh.pop %v980
    %983 = vrot.lane.b32.xlu0 %v981, 64
    %v984 = vpop.permute.xlu0 %983
    %v986 = vmul.f32 %v969, %v984
    %v987 = vmax.f32 %v895, %v986
    %v989 = vrot.slane %v987, 2
    %v991 = vsub.f32 %v987, %v989
    %v992 = vand.u32 2147483647, %v991
    %v993 = vmul.f32 %v987, %v989
    %994 = vrot.lane.b32.xlu0 %v989, 64
    %v995 = vpop.permute.xlu0 %994
    %998 = vrot.lane.b32.xlu0 %v993, 64
    %v999 = vpop.permute.xlu0 %998
    %v1001 = vsel %vm124, %v987, %v995
    %v1002 = vsel %vm124, %v992, %v999
    %v1003 = vld [vmem:[#allocation3] sm:$0xf]
    %v1004 = vld [vmem:[#allocation3 + $0x4] sm:$0xf]
    %v1005 = vld [vmem:[#allocation3 + $0x8] sm:$0xf]
    %v1006 = vld [vmem:[#allocation3 + $0xc] sm:$0xf]
    %v1007 = vld [vmem:[#allocation3 + $0x10] sm:$0xf]
    %v1008 = vld [vmem:[#allocation3 + $0x14] sm:$0xf]
    %v1009 = vld [vmem:[#allocation3 + $0x18] sm:$0xf]
    %v1010 = vld [vmem:[#allocation3 + $0x1c] sm:$0xf]
    %v1011 = vld [vmem:[#allocation3 + $0x20] sm:$0xf]
    %v1012 = vld [vmem:[#allocation3 + $0x24] sm:$0xf]
    %v1013 = vld [vmem:[#allocation3 + $0x28] sm:$0xf]
    %v1014 = vld [vmem:[#allocation3 + $0x2c] sm:$0xf]
    %v1015 = vld [vmem:[#allocation3 + $0x30] sm:$0xf]
    %v1016 = vld [vmem:[#allocation3 + $0x34] sm:$0xf]
    %v1017 = vld [vmem:[#allocation3 + $0x38] sm:$0xf]
    %v1018 = vld [vmem:[#allocation3 + $0x3c] sm:$0xf]
    %v1019 = vld [vmem:[#allocation3 + $0x40] sm:$0xf]
    %v1020 = vld [vmem:[#allocation3 + $0x44] sm:$0xf]
    %v1021 = vld [vmem:[#allocation3 + $0x48] sm:$0xf]
    %v1022 = vld [vmem:[#allocation3 + $0x4c] sm:$0xf]
    %v1023 = vld [vmem:[#allocation3 + $0x50] sm:$0xf]
    %v1024 = vld [vmem:[#allocation3 + $0x54] sm:$0xf]
    %v1025 = vld [vmem:[#allocation3 + $0x58] sm:$0xf]
    %v1026 = vld [vmem:[#allocation3 + $0x5c] sm:$0xf]
    %v1027 = vld [vmem:[#allocation3 + $0x60] sm:$0xf]
    %v1028 = vld [vmem:[#allocation3 + $0x64] sm:$0xf]
    %v1029 = vld [vmem:[#allocation3 + $0x68] sm:$0xf]
    %v1030 = vld [vmem:[#allocation3 + $0x6c] sm:$0xf]
    %v1031 = vld [vmem:[#allocation3 + $0x70] sm:$0xf]
    %v1032 = vld [vmem:[#allocation3 + $0x74] sm:$0xf]
    %v1033 = vld [vmem:[#allocation3 + $0x78] sm:$0xf]
    %v1034 = vld [vmem:[#allocation3 + $0x7c] sm:$0xf]
    %v1035 = vld [vmem:[#allocation3 + $0x80] sm:$0xf]
    %v1036 = vld [vmem:[#allocation3 + $0x84] sm:$0xf]
    %v1037 = vld [vmem:[#allocation3 + $0x88] sm:$0xf]
    %v1038 = vld [vmem:[#allocation3 + $0x8c] sm:$0xf]
    %v1039 = vld [vmem:[#allocation3 + $0x90] sm:$0xf]
    %v1040 = vld [vmem:[#allocation3 + $0x94] sm:$0xf]
    %v1041 = vld [vmem:[#allocation3 + $0x98] sm:$0xf]
    %v1042 = vld [vmem:[#allocation3 + $0x9c] sm:$0xf]
    %v1043 = vld [vmem:[#allocation3 + $0xa0] sm:$0xf]
    %v1044 = vld [vmem:[#allocation3 + $0xa4] sm:$0xf]
    %v1045 = vld [vmem:[#allocation3 + $0xa8] sm:$0xf]
    %v1046 = vld [vmem:[#allocation3 + $0xac] sm:$0xf]
    %v1047 = vld [vmem:[#allocation3 + $0xb0] sm:$0xf]
    %v1048 = vld [vmem:[#allocation3 + $0xb4] sm:$0xf]
    %v1049 = vld [vmem:[#allocation3 + $0xb8] sm:$0xf]
    %v1050 = vld [vmem:[#allocation3 + $0xbc] sm:$0xf]
    %v1051 = vld [vmem:[#allocation3 + $0xc0] sm:$0xf]
    %v1052 = vld [vmem:[#allocation3 + $0xc4] sm:$0xf]
    %v1053 = vld [vmem:[#allocation3 + $0xc8] sm:$0xf]
    %v1054 = vld [vmem:[#allocation3 + $0xcc] sm:$0xf]
    %v1055 = vld [vmem:[#allocation3 + $0xd0] sm:$0xf]
    %v1056 = vld [vmem:[#allocation3 + $0xd4] sm:$0xf]
    %v1057 = vld [vmem:[#allocation3 + $0xd8] sm:$0xf]
    %v1058 = vld [vmem:[#allocation3 + $0xdc] sm:$0xf]
    %v1059 = vld [vmem:[#allocation3 + $0xe0] sm:$0xf]
    %v1060 = vld [vmem:[#allocation3 + $0xe4] sm:$0xf]
    %v1061 = vld [vmem:[#allocation3 + $0xe8] sm:$0xf]
    %v1062 = vld [vmem:[#allocation3 + $0xec] sm:$0xf]
    %v1063 = vld [vmem:[#allocation3 + $0xf0] sm:$0xf]
    %v1064 = vld [vmem:[#allocation3 + $0xf4] sm:$0xf]
    %v1065 = vld [vmem:[#allocation3 + $0xf8] sm:$0xf]
    %v1066 = vld [vmem:[#allocation3 + $0xfc] sm:$0xf]
    %v1067 = vld [vmem:[%s3] sm:$0xff]
    %v1068 = vpack.c.bf16 %v1001, %v1001
    %v1069 = vpack.c.bf16 %v1002, %v1002
    %v1070 = vperm.slane %v1067, 0
    %v1103 = vunpack.c.l.b16 %v1003
    %v1104 = vunpack.c.l.b16 %v1004
    %v1105 = vunpack.c.l.b16 %v1005
    %v1106 = vunpack.c.l.b16 %v1006
    %v1107 = vunpack.c.l.b16 %v1007
    %v1108 = vunpack.c.l.b16 %v1008
    %v1109 = vunpack.c.l.b16 %v1009
    %v1110 = vunpack.c.l.b16 %v1010
    %v1111 = vunpack.c.l.b16 %v1011
    %v1112 = vunpack.c.l.b16 %v1012
    %v1113 = vunpack.c.l.b16 %v1013
    %v1114 = vunpack.c.l.b16 %v1014
    %v1115 = vunpack.c.l.b16 %v1015
    %v1116 = vunpack.c.l.b16 %v1016
    %v1117 = vunpack.c.l.b16 %v1017
    %v1118 = vunpack.c.l.b16 %v1018
    %v1119 = vunpack.c.l.b16 %v1019
    %v1120 = vunpack.c.l.b16 %v1020
    %v1121 = vunpack.c.l.b16 %v1021
    %v1122 = vunpack.c.l.b16 %v1022
    %v1123 = vunpack.c.l.b16 %v1023
    %v1124 = vunpack.c.l.b16 %v1024
    %v1125 = vunpack.c.l.b16 %v1025
    %v1126 = vunpack.c.l.b16 %v1026
    %v1127 = vunpack.c.l.b16 %v1027
    %v1128 = vunpack.c.l.b16 %v1028
    %v1129 = vunpack.c.l.b16 %v1029
    %v1130 = vunpack.c.l.b16 %v1030
    %v1131 = vunpack.c.l.b16 %v1031
    %v1132 = vunpack.c.l.b16 %v1032
    %v1133 = vunpack.c.l.b16 %v1033
    %v1134 = vunpack.c.l.b16 %v1034
    %v1135 = vpack.c.b16 %v1104, %v1103
    %v1136 = vpack.c.b16 %v1106, %v1105
    %v1137 = vpack.c.b16 %v1108, %v1107
    %v1138 = vpack.c.b16 %v1110, %v1109
    %v1139 = vpack.c.b16 %v1112, %v1111
    %v1140 = vpack.c.b16 %v1114, %v1113
    %v1141 = vpack.c.b16 %v1116, %v1115
    %v1142 = vpack.c.b16 %v1118, %v1117
    %v1143 = vpack.c.b16 %v1120, %v1119
    %v1144 = vpack.c.b16 %v1122, %v1121
    %v1145 = vpack.c.b16 %v1124, %v1123
    %v1146 = vpack.c.b16 %v1126, %v1125
    %v1147 = vpack.c.b16 %v1128, %v1127
    %v1148 = vpack.c.b16 %v1130, %v1129
    %v1149 = vpack.c.b16 %v1132, %v1131
    %v1150 = vpack.c.b16 %v1134, %v1133
    %1167 = vmatpush.bf16.msra.mxu0 %v1142
    %1168 = vmatpush.bf16.msra.mxu0 %v1141
    %1169 = vmatpush.bf16.msra.mxu0 %v1140
    %1170 = vmatpush.bf16.msra.mxu0 %v1139
    %1171 = vmatpush.bf16.msra.mxu0 %v1138
    %1172 = vmatpush.bf16.msra.mxu0 %v1137
    %1173 = vmatpush.bf16.msra.mxu0 %v1136
    %1174 = vmatpush.bf16.msra.mxu0 %v1135
    %1175 = vmatmul.bf16.gmra.mxu0 %v1068
    %v1176 = vpop.f32.mrf.mxu0
    %v1177 = vadd.f32 %v1070, %v1176
    %v1178 = vpop.f32.mrf.mxu0
    %1179 = vdwg.mxu0
    %1180 = vmatpush.bf16.msra.mxu0 %v1150
    %1181 = vmatpush.bf16.msra.mxu0 %v1149
    %1182 = vmatpush.bf16.msra.mxu0 %v1148
    %1183 = vmatpush.bf16.msra.mxu0 %v1147
    %1184 = vmatpush.bf16.msra.mxu0 %v1146
    %1185 = vmatpush.bf16.msra.mxu0 %v1145
    %1186 = vmatpush.bf16.msra.mxu0 %v1144
    %1187 = vmatpush.bf16.msra.mxu0 %v1143
    %1188 = vmatmul.bf16.gmra.mxu0 %v1069
    %v1189 = vpop.f32.mrf.mxu0
    %v1190 = vadd.f32 %v1177, %v1189
    %v1191 = vpop.f32.mrf.mxu0
    %1192 = vdwg.mxu0
    %v1193 = vtanh.pop %v1190
    %v1194 = vpack.c.bf16 %v1193, %v1193
    %v1195 = vperm.slane %v1067, 1
    %v1212 = vunpack.c.l.b16 %v1035
    %v1213 = vunpack.c.l.b16 %v1036
    %v1214 = vunpack.c.l.b16 %v1037
    %v1215 = vunpack.c.l.b16 %v1038
    %v1216 = vunpack.c.l.b16 %v1039
    %v1217 = vunpack.c.l.b16 %v1040
    %v1218 = vunpack.c.l.b16 %v1041
    %v1219 = vunpack.c.l.b16 %v1042
    %v1220 = vunpack.c.l.b16 %v1043
    %v1221 = vunpack.c.l.b16 %v1044
    %v1222 = vunpack.c.l.b16 %v1045
    %v1223 = vunpack.c.l.b16 %v1046
    %v1224 = vunpack.c.l.b16 %v1047
    %v1225 = vunpack.c.l.b16 %v1048
    %v1226 = vunpack.c.l.b16 %v1049
    %v1227 = vunpack.c.l.b16 %v1050
    %v1228 = vpack.c.b16 %v1213, %v1212
    %v1229 = vpack.c.b16 %v1215, %v1214
    %v1230 = vpack.c.b16 %v1217, %v1216
    %v1231 = vpack.c.b16 %v1219, %v1218
    %v1232 = vpack.c.b16 %v1221, %v1220
    %v1233 = vpack.c.b16 %v1223, %v1222
    %v1234 = vpack.c.b16 %v1225, %v1224
    %v1235 = vpack.c.b16 %v1227, %v1226
    %1244 = vmatpush.bf16.msra.mxu0 %v1235
    %1245 = vmatpush.bf16.msra.mxu0 %v1234
    %1246 = vmatpush.bf16.msra.mxu0 %v1233
    %1247 = vmatpush.bf16.msra.mxu0 %v1232
    %1248 = vmatpush.bf16.msra.mxu0 %v1231
    %1249 = vmatpush.bf16.msra.mxu0 %v1230
    %1250 = vmatpush.bf16.msra.mxu0 %v1229
    %1251 = vmatpush.bf16.msra.mxu0 %v1228
    %1252 = vmatmul.bf16.gmra.mxu0 %v1194
    %v1253 = vpop.f32.mrf.mxu0
    %v1254 = vadd.f32 %v1195, %v1253
    %v1255 = vpop.f32.mrf.mxu0
    %1256 = vdwg.mxu0
    %v1257 = vtanh.pop %v1254
    %v1258 = vpack.c.bf16 %v1257, %v1257
    %v1259 = vperm.slane %v1067, 2
    %v1276 = vunpack.c.l.b16 %v1051
    %v1277 = vunpack.c.l.b16 %v1052
    %v1278 = vunpack.c.l.b16 %v1053
    %v1279 = vunpack.c.l.b16 %v1054
    %v1280 = vunpack.c.l.b16 %v1055
    %v1281 = vunpack.c.l.b16 %v1056
    %v1282 = vunpack.c.l.b16 %v1057
    %v1283 = vunpack.c.l.b16 %v1058
    %v1284 = vunpack.c.l.b16 %v1059
    %v1285 = vunpack.c.l.b16 %v1060
    %v1286 = vunpack.c.l.b16 %v1061
    %v1287 = vunpack.c.l.b16 %v1062
    %v1288 = vunpack.c.l.b16 %v1063
    %v1289 = vunpack.c.l.b16 %v1064
    %v1290 = vunpack.c.l.b16 %v1065
    %v1291 = vunpack.c.l.b16 %v1066
    %v1292 = vpack.c.b16 %v1277, %v1276
    %v1293 = vpack.c.b16 %v1279, %v1278
    %v1294 = vpack.c.b16 %v1281, %v1280
    %v1295 = vpack.c.b16 %v1283, %v1282
    %v1296 = vpack.c.b16 %v1285, %v1284
    %v1297 = vpack.c.b16 %v1287, %v1286
    %v1298 = vpack.c.b16 %v1289, %v1288
    %v1299 = vpack.c.b16 %v1291, %v1290
    %1308 = vmatpush.bf16.msra.mxu0 %v1299
    %1309 = vmatpush.bf16.msra.mxu0 %v1298
    %1310 = vmatpush.bf16.msra.mxu0 %v1297
    %1311 = vmatpush.bf16.msra.mxu0 %v1296
    %1312 = vmatpush.bf16.msra.mxu0 %v1295
    %1313 = vmatpush.bf16.msra.mxu0 %v1294
    %1314 = vmatpush.bf16.msra.mxu0 %v1293
    %1315 = vmatpush.bf16.msra.mxu0 %v1292
    %1316 = vmatmul.bf16.gmra.mxu0 %v1258
    %v1317 = vpop.f32.mrf.mxu0
    %v1318 = vadd.f32 %v1259, %v1317
    %v1319 = vpop.f32.mrf.mxu0
    %1320 = vdwg.mxu0
    %1321 = vst [vmem:[#allocation6] sm:$0x3] %v1318
    // Predicated region
    $region22: #{nlinet_forward.1} parent=1 // pred_check
      _
    $region23: #{nlinet_forward.1} parent=1 // pred_check_branch
      %1323 = sbr.rel (0) target = $region25
    $region24: #{nlinet_forward.1} parent=1 // pred_region
      %1325 = vsyncadd [#allocation5], 0
      %s1327 = sshll.u32 [#allocation6], 4
      %s1328 = int_to_ptr.vmem [resolvable:$true] %s1327
      %s1329 = sshll.u32 %s4, 4
      %s1330 = int_to_ptr.hbm [resolvable:$true] %s1329
      %1332 = dma.vmem_to_hbm [thread:$0]  %s1328, 32, %s1330, [#allocation5]
    $region25: #{nlinet_forward.1} parent=1 // pred_fallthru
      _
    // Predicated region
    $region26: #{nlinet_forward.1} parent=1 // pred_check
      _
    $region27: #{nlinet_forward.1} parent=1 // pred_check_branch
      %1334 = sbr.rel (0) target = $region29
    $region28: #{nlinet_forward.1} parent=1 // pred_region
      %1336 = dma.done [#allocation5], 32
    $region29: #{nlinet_forward.1} parent=1 // pred_fallthru
      _
    %1337 = vsyncpa [#allocation4], 1
    %1338 = vsyncpa [#allocation5], 1

</llo_original>
